<compile_context>
chip_gen: v5e
topology: v5e:2x2
jax: 0.10.0
libtpu: 0.0.40
codegen_flags: <defaults>
</compile_context>

<pallas_src>
import functools

import numpy as np
import jax
import jax.numpy as jnp
from jax.experimental import pallas as pl
from jax.experimental.pallas import tpu as pltpu

BN_EPS = 1e-5          # nn.BatchNorm2d default eps
LEAKY_SLOPE = 0.01     # nn.LeakyReLU / F.leaky_relu default negative_slope
LANES = 128            # TPU vreg lane width: keep every channel axis a multiple of this
COL0 = 8               # sublane-aligned column offset of the interior inside the halo scratch


def _round_up(x, m):
    return (x + m - 1) // m * m


def _leaky(x):
    return jnp.where(x > 0, x, LEAKY_SLOPE * x)


# --------------------------------------------------------------------------- kernel
def fused_ib_kernel(*refs, k, stride, H, W, Ho, Wo, cin_p, chid_p, cout_p):
    """Whole InvertedBottleneck block for one batch element, VMEM-resident.

    Stages (all fused, no HBM between them):
      1) 1x1 expand (MXU) + folded-BN shift + LeakyReLU -> zero-halo VMEM scratch
      2) kxk depthwise (VPU, k*k shifted ref-slice reads) + folded-BN shift + LeakyReLU
      3) stride-s decimation as a 0/1 selection matmul (MXU) when stride > 1
      4) 1x1 linear projection (MXU) + folded-BN shift
      5) 1x1 branch conv on the decimated input (MXU) + folded-BN shift + LeakyReLU
      6) residual add + LeakyReLU -> lane-dense (..., 128) output store
    """
    if stride > 1:
        (x_ref, w1_ref, t1_ref, wd_ref, td_ref, w3_ref, t3_ref,
         wb_ref, tb_ref, sel_ref, o_ref, e_ref) = refs
    else:
        (x_ref, w1_ref, t1_ref, wd_ref, td_ref, w3_ref, t3_ref,
         wb_ref, tb_ref, o_ref, e_ref) = refs
        sel_ref = None

    pad = (k - 1) // 2

    # Zero the halo scratch (tiny vs. the rest; done every step so every megacore shard
    # sees an initialized halo).
    e_ref[...] = jnp.zeros_like(e_ref)

    # -- 1) 1x1 expand -----------------------------------------------------------
    x = x_ref[0]                                    # (H, W, cin_p)
    xf = x.reshape(H * W, cin_p)
    e = jnp.dot(xf, w1_ref[...], preferred_element_type=jnp.float32) + t1_ref[...]
    # Interior stored at a sublane-aligned offset -> unmasked aligned store.
    e_ref[pad:pad + H, COL0:COL0 + W, :] = _leaky(e).reshape(H, W, chid_p)

    # -- 2) depthwise kxk (stride 1 over the VMEM scratch; taps = static ref slices)
    wd = wd_ref[...]                                # (k, k, chid_p), BN scale pre-folded
    acc = jnp.zeros((H, W, chid_p), jnp.float32)
    for dy in range(k):
        for dx in range(k):
            tap = e_ref[dy:dy + H, COL0 - pad + dx:COL0 - pad + dx + W, :]
            acc = acc + tap * wd[dy, dx]
    dwf = _leaky(acc + td_ref[...].reshape(1, 1, chid_p)).reshape(H * W, chid_p)

    # -- 3) stride-s decimation on the (otherwise idle) MXU ------------------------
    if sel_ref is None:
        dws, xs = dwf, xf
    else:
        sel = sel_ref[...]                          # (Ho*Wo, H*W), constant 0/1
        dws = jnp.dot(sel, dwf, preferred_element_type=jnp.float32)
        xs = jnp.dot(sel, xf, preferred_element_type=jnp.float32)

    # -- 4/5/6) linear projection + branch + residual + LeakyReLU ------------------
    main = jnp.dot(dws, w3_ref[...], preferred_element_type=jnp.float32) + t3_ref[...]
    br = _leaky(jnp.dot(xs, wb_ref[...], preferred_element_type=jnp.float32) + tb_ref[...])
    o_ref[...] = _leaky(main + br).reshape(1, Ho, Wo, cout_p)


# --------------------------------------------------------------------------- wrapper
def inverted_bottleneck(x_nchw, folded, *, c_out, k, stride):
    """Fused Pallas forward. x_nchw: (N, c_in, H, W) float32 (PyTorch layout)."""
    N, c_in, H, W = x_nchw.shape
    c_hidden = 3 * c_in
    pad = (k - 1) // 2
    assert k % 2 == 1 and pad <= COL0, "odd k with (k-1)//2 <= 8 supported"
    assert W % 8 == 0, "demo assumes 8-aligned width"
    Ho = (H - 1) // stride + 1
    Wo = (W - 1) // stride + 1
    assert Wo % 8 == 0, "demo assumes 8-aligned output width"

    cin_p = _round_up(c_in, LANES)
    chid_p = _round_up(c_hidden, LANES)
    cout_p = _round_up(c_out, LANES)

    # NCHW -> NHWC, zero-pad channels to a lane-dense multiple of 128.
    x = jnp.transpose(x_nchw.astype(jnp.float32), (0, 2, 3, 1))
    x = jnp.pad(x, ((0, 0), (0, 0), (0, 0), (0, cin_p - c_in)))

    args = [x, folded["w1"], folded["t1"], folded["wd"], folded["td"],
            folded["w3"], folded["t3"], folded["wb"], folded["tb"]]
    in_specs = [
        pl.BlockSpec((1, H, W, cin_p), lambda n: (n, 0, 0, 0)),
        pl.BlockSpec((cin_p, chid_p), lambda n: (0, 0)),
        pl.BlockSpec((1, chid_p), lambda n: (0, 0)),
        pl.BlockSpec((k, k, chid_p), lambda n: (0, 0, 0)),
        pl.BlockSpec((1, chid_p), lambda n: (0, 0)),
        pl.BlockSpec((chid_p, cout_p), lambda n: (0, 0)),
        pl.BlockSpec((1, cout_p), lambda n: (0, 0)),
        pl.BlockSpec((cin_p, cout_p), lambda n: (0, 0)),
        pl.BlockSpec((1, cout_p), lambda n: (0, 0)),
    ]
    if stride > 1:
        # Constant 0/1 matrix selecting the flattened positions (s*i, s*j).
        sel = np.zeros((Ho * Wo, H * W), np.float32)
        r = np.arange(Ho * Wo)
        sel[r, (r // Wo) * stride * W + (r % Wo) * stride] = 1.0
        args.append(jnp.asarray(sel))
        in_specs.append(pl.BlockSpec((Ho * Wo, H * W), lambda n: (0, 0)))

    kernel = functools.partial(
        fused_ib_kernel, k=k, stride=stride, H=H, W=W, Ho=Ho, Wo=Wo,
        cin_p=cin_p, chid_p=chid_p, cout_p=cout_p)

    out = pl.pallas_call(
        kernel,
        out_shape=jax.ShapeDtypeStruct((N, Ho, Wo, cout_p), jnp.float32),
        grid=(N,),                                   # >=2 parallel steps -> both v7x cores
        in_specs=in_specs,
        out_specs=pl.BlockSpec((1, Ho, Wo, cout_p), lambda n: (n, 0, 0, 0)),
        scratch_shapes=[
            pltpu.VMEM((H + 2 * pad, W + 2 * COL0, chid_p), jnp.float32)],
        compiler_params=pltpu.CompilerParams(
            dimension_semantics=("parallel",),
            vmem_limit_bytes=32 * 1024 * 1024),      # explicit scoped-VMEM budget (v7x-safe)
    )(*args)

    # Back to PyTorch NCHW, drop the channel padding.
    return jnp.transpose(out[..., :c_out], (0, 3, 1, 2))


# --------------------------------------------------------------------------- params
def init_raw_params(key, k, c_in, c_out):
    """Synthetic parameters in PyTorch layouts (conv OIHW + BatchNorm running stats)."""
    c_hidden = 3 * c_in
    ks = jax.random.split(key, 12)

    def bn(kk, c):
        k1, k2, k3, k4 = jax.random.split(kk, 4)
        return dict(gamma=1.0 + 0.1 * jax.random.normal(k1, (c,)),
                    beta=0.1 * jax.random.normal(k2, (c,)),
                    mean=0.1 * jax.random.normal(k3, (c,)),
                    var=1.0 + 0.5 * jax.random.uniform(k4, (c,)))

    return dict(
        w1=jax.random.normal(ks[0], (c_hidden, c_in, 1, 1)) / float(np.sqrt(c_in)),
        b1=0.05 * jax.random.normal(ks[1], (c_hidden,)),
        bn1=bn(ks[2], c_hidden),
        wd=jax.random.normal(ks[3], (c_hidden, 1, k, k)) / float(k),
        bd=0.05 * jax.random.normal(ks[4], (c_hidden,)),
        bn2=bn(ks[5], c_hidden),
        w3=jax.random.normal(ks[6], (c_out, c_hidden, 1, 1)) / float(np.sqrt(c_hidden)),
        b3=0.05 * jax.random.normal(ks[7], (c_out,)),
        bn3=bn(ks[8], c_out),
        wb=jax.random.normal(ks[9], (c_out, c_in, 1, 1)) / float(np.sqrt(c_in)),
        bb=0.05 * jax.random.normal(ks[10], (c_out,)),
        bnb=bn(ks[11], c_out),
    )


def prepare_folded_params(raw):
    """Fold inference-mode BatchNorm into conv weights/shifts; pad channel axes to 128."""
    c_hidden, c_in = raw["w1"].shape[:2]
    c_out = raw["w3"].shape[0]
    cin_p, chid_p, cout_p = (_round_up(c, LANES) for c in (c_in, c_hidden, c_out))

    def fold(w2d, bias, bnp):
        s = bnp["gamma"] / jnp.sqrt(bnp["var"] + BN_EPS)
        return w2d * s[None, :], (bias - bnp["mean"]) * s + bnp["beta"]

    def pad2(a, r, c):
        return jnp.pad(a, ((0, r - a.shape[0]), (0, c - a.shape[1])))

    w1, t1 = fold(raw["w1"][:, :, 0, 0].T, raw["b1"], raw["bn1"])      # (c_in, c_hidden)
    w3, t3 = fold(raw["w3"][:, :, 0, 0].T, raw["b3"], raw["bn3"])      # (c_hidden, c_out)
    wb, tb = fold(raw["wb"][:, :, 0, 0].T, raw["bb"], raw["bnb"])      # (c_in, c_out)
    sd = raw["bn2"]["gamma"] / jnp.sqrt(raw["bn2"]["var"] + BN_EPS)
    wd = jnp.transpose(raw["wd"][:, 0], (1, 2, 0)) * sd[None, None, :]  # (k, k, c_hidden)
    td = (raw["bd"] - raw["bn2"]["mean"]) * sd + raw["bn2"]["beta"]

    return dict(
        w1=pad2(w1, cin_p, chid_p), t1=pad2(t1[None, :], 1, chid_p),
        wd=jnp.pad(wd, ((0, 0), (0, 0), (0, chid_p - c_hidden))),
        td=pad2(td[None, :], 1, chid_p),
        w3=pad2(w3, chid_p, cout_p), t3=pad2(t3[None, :], 1, cout_p),
        wb=pad2(wb, cin_p, cout_p), tb=pad2(tb[None, :], 1, cout_p),
    )


# --------------------------------------------------------------------------- reference
def reference_forward(x, raw, *, k, stride):
    """Pure-JAX (XLA) replica of the PyTorch InvertedBottleneck (inference-mode BN)."""
    c_hidden = raw["w1"].shape[0]
    hi = jax.lax.Precision.HIGHEST

    def conv(h, w, b, stride=1, padding=0, groups=1):
        y = jax.lax.conv_general_dilated(
            h, w, window_strides=(stride, stride),
            padding=((padding, padding), (padding, padding)),
            dimension_numbers=("NCHW", "OIHW", "NCHW"),
            feature_group_count=groups, precision=hi)
        return y + b.reshape(1, -1, 1, 1)

    def bn(h, p):
        s = p["gamma"] / jnp.sqrt(p["var"] + BN_EPS)
        return (h - p["mean"].reshape(1, -1, 1, 1)) * s.reshape(1, -1, 1, 1) \
            + p["beta"].reshape(1, -1, 1, 1)

    pad = (k - 1) // 2
    h = _leaky(bn(conv(x, raw["w1"], raw["b1"]), raw["bn1"]))
    h = _leaky(bn(conv(h, raw["wd"], raw["bd"], stride=stride, padding=pad,
                       groups=c_hidden), raw["bn2"]))
    h = bn(conv(h, raw["w3"], raw["b3"]), raw["bn3"])
    d = _leaky(bn(conv(x, raw["wb"], raw["bb"], stride=stride), raw["bnb"]))
    return _leaky(h + d)


# --------------------------------------------------------------------------- main
if __name__ == "__main__":
    key = jax.random.PRNGKey(0)
    # Primary case uses the suggested (2, 4, 16, 16) input; second case covers stride=1.
    cases = [
        dict(N=2, c_in=4, c_out=8, H=16, W=16, k=3, stride=2),
        dict(N=2, c_in=8, c_out=16, H=16, W=16, k=3, stride=1),
    ]
    for cfg in cases:
        key, kx, kp = jax.random.split(key, 3)
        x = jax.random.normal(kx, (cfg["N"], cfg["c_in"], cfg["H"], cfg["W"]), jnp.float32)
        raw = init_raw_params(kp, cfg["k"], cfg["c_in"], cfg["c_out"])
        folded = prepare_folded_params(raw)

        fwd = jax.jit(functools.partial(
            inverted_bottleneck, c_out=cfg["c_out"], k=cfg["k"], stride=cfg["stride"]))
        out = fwd(x, folded)
        jax.block_until_ready(out)

        ref = reference_forward(x, raw, k=cfg["k"], stride=cfg["stride"])
        Ho = (cfg["H"] - 1) // cfg["stride"] + 1
        Wo = (cfg["W"] - 1) // cfg["stride"] + 1
        assert out.shape == (cfg["N"], cfg["c_out"], Ho, Wo), out.shape
        assert bool(jnp.all(jnp.isfinite(out)))
        err = float(jnp.max(jnp.abs(out - ref)))
        assert err < 5e-2, f"max abs err vs reference: {err}"
    print("KERNEL_OK")
</pallas_src>

<mosaic_0001>
module attributes {stable_mosaic.version = 11 : i64} {
  func.func @fused_ib_kernel(%arg0: i32, %arg1: memref<1x16x16x128xf32, #tpu.memory_space<vmem>>, %arg2: memref<128x128xf32, #tpu.memory_space<vmem>>, %arg3: memref<1x128xf32, #tpu.memory_space<vmem>>, %arg4: memref<3x3x128xf32, #tpu.memory_space<vmem>>, %arg5: memref<1x128xf32, #tpu.memory_space<vmem>>, %arg6: memref<128x128xf32, #tpu.memory_space<vmem>>, %arg7: memref<1x128xf32, #tpu.memory_space<vmem>>, %arg8: memref<128x128xf32, #tpu.memory_space<vmem>>, %arg9: memref<1x128xf32, #tpu.memory_space<vmem>>, %arg10: memref<64x256xf32, #tpu.memory_space<vmem>>, %arg11: memref<1x8x8x128xf32, #tpu.memory_space<vmem>>, %arg12: memref<18x32x128xf32, #tpu.memory_space<vmem>>) attributes {dimension_semantics = [#tpu.dimension_semantics<parallel>], iteration_bounds = array<i64: 2>, scalar_prefetch = 0 : i64, scratch_operands = 1 : i64, tpu.core_type = #tpu.core_type<tc>, window_params = [{transform_indices = @transform_0, window_bounds = array<i64: 1, 16, 16, 128>}, {pipeline_mode = #tpu.pipeline_mode<synchronous>, transform_indices = @transform_1, window_bounds = array<i64: 128, 128>}, {pipeline_mode = #tpu.pipeline_mode<synchronous>, transform_indices = @transform_2, window_bounds = array<i64: 1, 128>}, {pipeline_mode = #tpu.pipeline_mode<synchronous>, transform_indices = @transform_3, window_bounds = array<i64: 3, 3, 128>}, {pipeline_mode = #tpu.pipeline_mode<synchronous>, transform_indices = @transform_4, window_bounds = array<i64: 1, 128>}, {pipeline_mode = #tpu.pipeline_mode<synchronous>, transform_indices = @transform_5, window_bounds = array<i64: 128, 128>}, {pipeline_mode = #tpu.pipeline_mode<synchronous>, transform_indices = @transform_6, window_bounds = array<i64: 1, 128>}, {pipeline_mode = #tpu.pipeline_mode<synchronous>, transform_indices = @transform_7, window_bounds = array<i64: 128, 128>}, {pipeline_mode = #tpu.pipeline_mode<synchronous>, transform_indices = @transform_8, window_bounds = array<i64: 1, 128>}, {pipeline_mode = #tpu.pipeline_mode<synchronous>, transform_indices = @transform_9, window_bounds = array<i64: 64, 256>}, {transform_indices = @transform_10, window_bounds = array<i64: 1, 8, 8, 128>}]} {
    %cst = arith.constant 0.000000e+00 : f32
    %0 = vector.broadcast %cst : f32 to vector<18x32x128xf32>
    %c0 = arith.constant 0 : index
    %c0_0 = arith.constant 0 : index
    %c0_1 = arith.constant 0 : index
    %1 = vector.load %arg12[%c0, %c0_0, %c0_1] : memref<18x32x128xf32, #tpu.memory_space<vmem>>, vector<18x32x128xf32>
    tpu.vector_store %arg12[%c0, %c0_0, %c0_1], %0 {strides = array<i32>} : memref<18x32x128xf32, #tpu.memory_space<vmem>>, vector<18x32x128xf32>,
    %c0_2 = arith.constant 0 : index
    %c0_3 = arith.constant 0 : index
    %c0_4 = arith.constant 0 : index
    %c0_5 = arith.constant 0 : index
    %2 = vector.load %arg1[%c0_2, %c0_3, %c0_4, %c0_5] : memref<1x16x16x128xf32, #tpu.memory_space<vmem>>, vector<1x16x16x128xf32>
    %3 = vector.shape_cast %2 : vector<1x16x16x128xf32> to vector<16x16x128xf32>
    %4 = vector.shape_cast %3 : vector<16x16x128xf32> to vector<256x128xf32>
    %c0_6 = arith.constant 0 : index
    %c0_7 = arith.constant 0 : index
    %5 = vector.load %arg2[%c0_6, %c0_7] : memref<128x128xf32, #tpu.memory_space<vmem>>, vector<128x128xf32>
    %cst_8 = arith.constant dense<0.000000e+00> : vector<256x128xf32>
    %6 = tpu.matmul %4, %5, %cst_8 {dimension_numbers = #tpu.dot_dimension_numbers<[1], [0], [0], [1], [0, 0, 1, 1], [], []>} : vector<256x128xf32>, vector<128x128xf32>, vector<256x128xf32> -> vector<256x128xf32>
    %c0_9 = arith.constant 0 : index
    %c0_10 = arith.constant 0 : index
    %7 = vector.load %arg3[%c0_9, %c0_10] : memref<1x128xf32, #tpu.memory_space<vmem>>, vector<1x128xf32>
    %8 = vector.broadcast %7 : vector<1x128xf32> to vector<256x128xf32>
    %9 = arith.addf %6, %8 : vector<256x128xf32>
    %cst_11 = arith.constant 0.000000e+00 : f32
    %10 = vector.broadcast %cst_11 : f32 to vector<256x128xf32>
    %11 = arith.cmpf ogt, %9, %10 : vector<256x128xf32>
    %cst_12 = arith.constant 0.00999999977 : f32
    %12 = vector.broadcast %cst_12 : f32 to vector<256x128xf32>
    %13 = arith.mulf %12, %9 : vector<256x128xf32>
    %14 = arith.select %11, %9, %13 : vector<256x128xi1>, vector<256x128xf32>
    %15 = vector.shape_cast %14 : vector<256x128xf32> to vector<16x16x128xf32>
    %c1 = arith.constant 1 : index
    %c8 = arith.constant 8 : index
    %c0_13 = arith.constant 0 : index
    %16 = vector.load %arg12[%c1, %c8, %c0_13] : memref<18x32x128xf32, #tpu.memory_space<vmem>>, vector<16x16x128xf32>
    tpu.vector_store %arg12[%c1, %c8, %c0_13], %15 {strides = array<i32>} : memref<18x32x128xf32, #tpu.memory_space<vmem>>, vector<16x16x128xf32>,
    %c0_14 = arith.constant 0 : index
    %c0_15 = arith.constant 0 : index
    %c0_16 = arith.constant 0 : index
    %17 = vector.load %arg4[%c0_14, %c0_15, %c0_16] : memref<3x3x128xf32, #tpu.memory_space<vmem>>, vector<3x3x128xf32>
    %cst_17 = arith.constant 0.000000e+00 : f32
    %18 = vector.broadcast %cst_17 : f32 to vector<16x16x128xf32>
    %c0_18 = arith.constant 0 : index
    %c7 = arith.constant 7 : index
    %c0_19 = arith.constant 0 : index
    %19 = vector.load %arg12[%c0_18, %c7, %c0_19] : memref<18x32x128xf32, #tpu.memory_space<vmem>>, vector<16x16x128xf32>
    %20 = vector.extract_strided_slice %17 {offsets = [0, 0, 0], sizes = [1, 1, 128], strides = [1, 1, 1]} : vector<3x3x128xf32> to vector<1x1x128xf32>
    %21 = vector.shape_cast %20 : vector<1x1x128xf32> to vector<128xf32>
    %22 = vector.shape_cast %21 : vector<128xf32> to vector<1x1x128xf32>
    %23 = vector.broadcast %22 : vector<1x1x128xf32> to vector<16x16x128xf32>
    %24 = arith.mulf %19, %23 : vector<16x16x128xf32>
    %25 = arith.addf %18, %24 : vector<16x16x128xf32>
    %c0_20 = arith.constant 0 : index
    %c8_21 = arith.constant 8 : index
    %c0_22 = arith.constant 0 : index
    %26 = vector.load %arg12[%c0_20, %c8_21, %c0_22] : memref<18x32x128xf32, #tpu.memory_space<vmem>>, vector<16x16x128xf32>
    %27 = vector.extract_strided_slice %17 {offsets = [0, 1, 0], sizes = [1, 1, 128], strides = [1, 1, 1]} : vector<3x3x128xf32> to vector<1x1x128xf32>
    %28 = vector.shape_cast %27 : vector<1x1x128xf32> to vector<128xf32>
    %29 = vector.shape_cast %28 : vector<128xf32> to vector<1x1x128xf32>
    %30 = vector.broadcast %29 : vector<1x1x128xf32> to vector<16x16x128xf32>
    %31 = arith.mulf %26, %30 : vector<16x16x128xf32>
    %32 = arith.addf %25, %31 : vector<16x16x128xf32>
    %c0_23 = arith.constant 0 : index
    %c9 = arith.constant 9 : index
    %c0_24 = arith.constant 0 : index
    %33 = vector.load %arg12[%c0_23, %c9, %c0_24] : memref<18x32x128xf32, #tpu.memory_space<vmem>>, vector<16x16x128xf32>
    %34 = vector.extract_strided_slice %17 {offsets = [0, 2, 0], sizes = [1, 1, 128], strides = [1, 1, 1]} : vector<3x3x128xf32> to vector<1x1x128xf32>
    %35 = vector.shape_cast %34 : vector<1x1x128xf32> to vector<128xf32>
    %36 = vector.shape_cast %35 : vector<128xf32> to vector<1x1x128xf32>
    %37 = vector.broadcast %36 : vector<1x1x128xf32> to vector<16x16x128xf32>
    %38 = arith.mulf %33, %37 : vector<16x16x128xf32>
    %39 = arith.addf %32, %38 : vector<16x16x128xf32>
    %c1_25 = arith.constant 1 : index
    %c7_26 = arith.constant 7 : index
    %c0_27 = arith.constant 0 : index
    %40 = vector.load %arg12[%c1_25, %c7_26, %c0_27] : memref<18x32x128xf32, #tpu.memory_space<vmem>>, vector<16x16x128xf32>
    %41 = vector.extract_strided_slice %17 {offsets = [1, 0, 0], sizes = [1, 1, 128], strides = [1, 1, 1]} : vector<3x3x128xf32> to vector<1x1x128xf32>
    %42 = vector.shape_cast %41 : vector<1x1x128xf32> to vector<128xf32>
    %43 = vector.shape_cast %42 : vector<128xf32> to vector<1x1x128xf32>
    %44 = vector.broadcast %43 : vector<1x1x128xf32> to vector<16x16x128xf32>
    %45 = arith.mulf %40, %44 : vector<16x16x128xf32>
    %46 = arith.addf %39, %45 : vector<16x16x128xf32>
    %c1_28 = arith.constant 1 : index
    %c8_29 = arith.constant 8 : index
    %c0_30 = arith.constant 0 : index
    %47 = vector.load %arg12[%c1_28, %c8_29, %c0_30] : memref<18x32x128xf32, #tpu.memory_space<vmem>>, vector<16x16x128xf32>
    %48 = vector.extract_strided_slice %17 {offsets = [1, 1, 0], sizes = [1, 1, 128], strides = [1, 1, 1]} : vector<3x3x128xf32> to vector<1x1x128xf32>
    %49 = vector.shape_cast %48 : vector<1x1x128xf32> to vector<128xf32>
    %50 = vector.shape_cast %49 : vector<128xf32> to vector<1x1x128xf32>
    %51 = vector.broadcast %50 : vector<1x1x128xf32> to vector<16x16x128xf32>
    %52 = arith.mulf %47, %51 : vector<16x16x128xf32>
    %53 = arith.addf %46, %52 : vector<16x16x128xf32>
    %c1_31 = arith.constant 1 : index
    %c9_32 = arith.constant 9 : index
    %c0_33 = arith.constant 0 : index
    %54 = vector.load %arg12[%c1_31, %c9_32, %c0_33] : memref<18x32x128xf32, #tpu.memory_space<vmem>>, vector<16x16x128xf32>
    %55 = vector.extract_strided_slice %17 {offsets = [1, 2, 0], sizes = [1, 1, 128], strides = [1, 1, 1]} : vector<3x3x128xf32> to vector<1x1x128xf32>
    %56 = vector.shape_cast %55 : vector<1x1x128xf32> to vector<128xf32>
    %57 = vector.shape_cast %56 : vector<128xf32> to vector<1x1x128xf32>
    %58 = vector.broadcast %57 : vector<1x1x128xf32> to vector<16x16x128xf32>
    %59 = arith.mulf %54, %58 : vector<16x16x128xf32>
    %60 = arith.addf %53, %59 : vector<16x16x128xf32>
    %c2 = arith.constant 2 : index
    %c7_34 = arith.constant 7 : index
    %c0_35 = arith.constant 0 : index
    %61 = vector.load %arg12[%c2, %c7_34, %c0_35] : memref<18x32x128xf32, #tpu.memory_space<vmem>>, vector<16x16x128xf32>
    %62 = vector.extract_strided_slice %17 {offsets = [2, 0, 0], sizes = [1, 1, 128], strides = [1, 1, 1]} : vector<3x3x128xf32> to vector<1x1x128xf32>
    %63 = vector.shape_cast %62 : vector<1x1x128xf32> to vector<128xf32>
    %64 = vector.shape_cast %63 : vector<128xf32> to vector<1x1x128xf32>
    %65 = vector.broadcast %64 : vector<1x1x128xf32> to vector<16x16x128xf32>
    %66 = arith.mulf %61, %65 : vector<16x16x128xf32>
    %67 = arith.addf %60, %66 : vector<16x16x128xf32>
    %c2_36 = arith.constant 2 : index
    %c8_37 = arith.constant 8 : index
    %c0_38 = arith.constant 0 : index
    %68 = vector.load %arg12[%c2_36, %c8_37, %c0_38] : memref<18x32x128xf32, #tpu.memory_space<vmem>>, vector<16x16x128xf32>
    %69 = vector.extract_strided_slice %17 {offsets = [2, 1, 0], sizes = [1, 1, 128], strides = [1, 1, 1]} : vector<3x3x128xf32> to vector<1x1x128xf32>
    %70 = vector.shape_cast %69 : vector<1x1x128xf32> to vector<128xf32>
    %71 = vector.shape_cast %70 : vector<128xf32> to vector<1x1x128xf32>
    %72 = vector.broadcast %71 : vector<1x1x128xf32> to vector<16x16x128xf32>
    %73 = arith.mulf %68, %72 : vector<16x16x128xf32>
    %74 = arith.addf %67, %73 : vector<16x16x128xf32>
    %c2_39 = arith.constant 2 : index
    %c9_40 = arith.constant 9 : index
    %c0_41 = arith.constant 0 : index
    %75 = vector.load %arg12[%c2_39, %c9_40, %c0_41] : memref<18x32x128xf32, #tpu.memory_space<vmem>>, vector<16x16x128xf32>
    %76 = vector.extract_strided_slice %17 {offsets = [2, 2, 0], sizes = [1, 1, 128], strides = [1, 1, 1]} : vector<3x3x128xf32> to vector<1x1x128xf32>
    %77 = vector.shape_cast %76 : vector<1x1x128xf32> to vector<128xf32>
    %78 = vector.shape_cast %77 : vector<128xf32> to vector<1x1x128xf32>
    %79 = vector.broadcast %78 : vector<1x1x128xf32> to vector<16x16x128xf32>
    %80 = arith.mulf %75, %79 : vector<16x16x128xf32>
    %81 = arith.addf %74, %80 : vector<16x16x128xf32>
    %c0_42 = arith.constant 0 : index
    %c0_43 = arith.constant 0 : index
    %82 = vector.load %arg5[%c0_42, %c0_43] : memref<1x128xf32, #tpu.memory_space<vmem>>, vector<1x128xf32>
    %83 = vector.shape_cast %82 : vector<1x128xf32> to vector<1x1x128xf32>
    %84 = vector.broadcast %83 : vector<1x1x128xf32> to vector<16x16x128xf32>
    %85 = arith.addf %81, %84 : vector<16x16x128xf32>
    %cst_44 = arith.constant 0.000000e+00 : f32
    %86 = vector.broadcast %cst_44 : f32 to vector<16x16x128xf32>
    %87 = arith.cmpf ogt, %85, %86 : vector<16x16x128xf32>
    %cst_45 = arith.constant 0.00999999977 : f32
    %88 = vector.broadcast %cst_45 : f32 to vector<16x16x128xf32>
    %89 = arith.mulf %88, %85 : vector<16x16x128xf32>
    %90 = arith.select %87, %85, %89 : vector<16x16x128xi1>, vector<16x16x128xf32>
    %91 = vector.shape_cast %90 : vector<16x16x128xf32> to vector<256x128xf32>
    %c0_46 = arith.constant 0 : index
    %c0_47 = arith.constant 0 : index
    %92 = vector.load %arg10[%c0_46, %c0_47] : memref<64x256xf32, #tpu.memory_space<vmem>>, vector<64x256xf32>
    %cst_48 = arith.constant dense<0.000000e+00> : vector<64x128xf32>
    %93 = tpu.matmul %92, %91, %cst_48 {dimension_numbers = #tpu.dot_dimension_numbers<[1], [0], [0], [1], [0, 0, 1, 1], [], []>} : vector<64x256xf32>, vector<256x128xf32>, vector<64x128xf32> -> vector<64x128xf32>
    %cst_49 = arith.constant dense<0.000000e+00> : vector<64x128xf32>
    %94 = tpu.matmul %92, %4, %cst_49 {dimension_numbers = #tpu.dot_dimension_numbers<[1], [0], [0], [1], [0, 0, 1, 1], [], []>} : vector<64x256xf32>, vector<256x128xf32>, vector<64x128xf32> -> vector<64x128xf32>
    %c0_50 = arith.constant 0 : index
    %c0_51 = arith.constant 0 : index
    %95 = vector.load %arg6[%c0_50, %c0_51] : memref<128x128xf32, #tpu.memory_space<vmem>>, vector<128x128xf32>
    %cst_52 = arith.constant dense<0.000000e+00> : vector<64x128xf32>
    %96 = tpu.matmul %93, %95, %cst_52 {dimension_numbers = #tpu.dot_dimension_numbers<[1], [0], [0], [1], [0, 0, 1, 1], [], []>} : vector<64x128xf32>, vector<128x128xf32>, vector<64x128xf32> -> vector<64x128xf32>
    %c0_53 = arith.constant 0 : index
    %c0_54 = arith.constant 0 : index
    %97 = vector.load %arg7[%c0_53, %c0_54] : memref<1x128xf32, #tpu.memory_space<vmem>>, vector<1x128xf32>
    %98 = vector.broadcast %97 : vector<1x128xf32> to vector<64x128xf32>
    %99 = arith.addf %96, %98 : vector<64x128xf32>
    %c0_55 = arith.constant 0 : index
    %c0_56 = arith.constant 0 : index
    %100 = vector.load %arg8[%c0_55, %c0_56] : memref<128x128xf32, #tpu.memory_space<vmem>>, vector<128x128xf32>
    %cst_57 = arith.constant dense<0.000000e+00> : vector<64x128xf32>
    %101 = tpu.matmul %94, %100, %cst_57 {dimension_numbers = #tpu.dot_dimension_numbers<[1], [0], [0], [1], [0, 0, 1, 1], [], []>} : vector<64x128xf32>, vector<128x128xf32>, vector<64x128xf32> -> vector<64x128xf32>
    %c0_58 = arith.constant 0 : index
    %c0_59 = arith.constant 0 : index
    %102 = vector.load %arg9[%c0_58, %c0_59] : memref<1x128xf32, #tpu.memory_space<vmem>>, vector<1x128xf32>
    %103 = vector.broadcast %102 : vector<1x128xf32> to vector<64x128xf32>
    %104 = arith.addf %101, %103 : vector<64x128xf32>
    %cst_60 = arith.constant 0.000000e+00 : f32
    %105 = vector.broadcast %cst_60 : f32 to vector<64x128xf32>
    %106 = arith.cmpf ogt, %104, %105 : vector<64x128xf32>
    %cst_61 = arith.constant 0.00999999977 : f32
    %107 = vector.broadcast %cst_61 : f32 to vector<64x128xf32>
    %108 = arith.mulf %107, %104 : vector<64x128xf32>
    %109 = arith.select %106, %104, %108 : vector<64x128xi1>, vector<64x128xf32>
    %110 = arith.addf %99, %109 : vector<64x128xf32>
    %cst_62 = arith.constant 0.000000e+00 : f32
    %111 = vector.broadcast %cst_62 : f32 to vector<64x128xf32>
    %112 = arith.cmpf ogt, %110, %111 : vector<64x128xf32>
    %cst_63 = arith.constant 0.00999999977 : f32
    %113 = vector.broadcast %cst_63 : f32 to vector<64x128xf32>
    %114 = arith.mulf %113, %110 : vector<64x128xf32>
    %115 = arith.select %112, %110, %114 : vector<64x128xi1>, vector<64x128xf32>
    %116 = vector.shape_cast %115 : vector<64x128xf32> to vector<1x8x8x128xf32>
    %c0_64 = arith.constant 0 : index
    %c0_65 = arith.constant 0 : index
    %c0_66 = arith.constant 0 : index
    %c0_67 = arith.constant 0 : index
    %117 = vector.load %arg11[%c0_64, %c0_65, %c0_66, %c0_67] : memref<1x8x8x128xf32, #tpu.memory_space<vmem>>, vector<1x8x8x128xf32>
    tpu.vector_store %arg11[%c0_64, %c0_65, %c0_66, %c0_67], %116 {strides = array<i32>} : memref<1x8x8x128xf32, #tpu.memory_space<vmem>>, vector<1x8x8x128xf32>,
    return
  }
  func.func @transform_0(%arg0: i32) -> (i32, i32, i32, i32) {
    %c0_i32 = arith.constant 0 : i32
    %c0_i32_0 = arith.constant 0 : i32
    %c0_i32_1 = arith.constant 0 : i32
    %c0_i32_2 = arith.constant 0 : i32
    return %arg0, %c0_i32, %c0_i32_0, %c0_i32_1 : i32, i32, i32, i32
  }
  func.func @transform_1(%arg0: i32) -> (i32, i32) {
    %c0_i32 = arith.constant 0 : i32
    %c0_i32_0 = arith.constant 0 : i32
    %c0_i32_1 = arith.constant 0 : i32
    return %c0_i32, %c0_i32_0 : i32, i32
  }
  func.func @transform_2(%arg0: i32) -> (i32, i32) {
    %c0_i32 = arith.constant 0 : i32
    %c0_i32_0 = arith.constant 0 : i32
    %c0_i32_1 = arith.constant 0 : i32
    return %c0_i32, %c0_i32_0 : i32, i32
  }
  func.func @transform_3(%arg0: i32) -> (i32, i32, i32) {
    %c0_i32 = arith.constant 0 : i32
    %c0_i32_0 = arith.constant 0 : i32
    %c0_i32_1 = arith.constant 0 : i32
    %c0_i32_2 = arith.constant 0 : i32
    return %c0_i32, %c0_i32_0, %c0_i32_1 : i32, i32, i32
  }
  func.func @transform_4(%arg0: i32) -> (i32, i32) {
    %c0_i32 = arith.constant 0 : i32
    %c0_i32_0 = arith.constant 0 : i32
    %c0_i32_1 = arith.constant 0 : i32
    return %c0_i32, %c0_i32_0 : i32, i32
  }
  func.func @transform_5(%arg0: i32) -> (i32, i32) {
    %c0_i32 = arith.constant 0 : i32
    %c0_i32_0 = arith.constant 0 : i32
    %c0_i32_1 = arith.constant 0 : i32
    return %c0_i32, %c0_i32_0 : i32, i32
  }
  func.func @transform_6(%arg0: i32) -> (i32, i32) {
    %c0_i32 = arith.constant 0 : i32
    %c0_i32_0 = arith.constant 0 : i32
    %c0_i32_1 = arith.constant 0 : i32
    return %c0_i32, %c0_i32_0 : i32, i32
  }
  func.func @transform_7(%arg0: i32) -> (i32, i32) {
    %c0_i32 = arith.constant 0 : i32
    %c0_i32_0 = arith.constant 0 : i32
    %c0_i32_1 = arith.constant 0 : i32
    return %c0_i32, %c0_i32_0 : i32, i32
  }
  func.func @transform_8(%arg0: i32) -> (i32, i32) {
    %c0_i32 = arith.constant 0 : i32
    %c0_i32_0 = arith.constant 0 : i32
    %c0_i32_1 = arith.constant 0 : i32
    return %c0_i32, %c0_i32_0 : i32, i32
  }
  func.func @transform_9(%arg0: i32) -> (i32, i32) {
    %c0_i32 = arith.constant 0 : i32
    %c0_i32_0 = arith.constant 0 : i32
    %c0_i32_1 = arith.constant 0 : i32
    return %c0_i32, %c0_i32_0 : i32, i32
  }
  func.func @transform_10(%arg0: i32) -> (i32, i32, i32, i32) {
    %c0_i32 = arith.constant 0 : i32
    %c0_i32_0 = arith.constant 0 : i32
    %c0_i32_1 = arith.constant 0 : i32
    %c0_i32_2 = arith.constant 0 : i32
    return %arg0, %c0_i32, %c0_i32_0, %c0_i32_1 : i32, i32, i32, i32
  }
}

</mosaic_0001>

<llo_original>
// kernel: inverted_bottleneck.1
$region0: #{inverted_bottleneck.1}
  #allocation0 [shape = 'u32[]', space=smem, size = 0x4, offset = 0x4, fixed_abs, tag = 'smem constant byte address 0x4 - core index']
  #allocation1 [shape = 'u32[72,128]{1,0:T(1,128)}', space=vmem, size = 0x9000, scoped, tag = 'internal scratch']
  #allocation2 [shape = 'f32[18,32,128]{2,1,0:T(8,128)}', space=vmem, size = 0x48000, scoped, tag = 'scratch operand']
  %s0 = inlined_call_operand.vmem [shape: f32[2,16,16,128], index: 0, kind: input, shape index: {}]
  %s1 = inlined_call_operand.vmem [shape: f32[128,128], index: 1, kind: input, shape index: {}]
  %s2 = inlined_call_operand.vmem [shape: f32[1,128], index: 2, kind: input, shape index: {}]
  %s3 = inlined_call_operand.vmem [shape: f32[3,3,128], index: 3, kind: input, shape index: {}]
  %s4 = inlined_call_operand.vmem [shape: f32[1,128], index: 4, kind: input, shape index: {}]
  %s5 = inlined_call_operand.vmem [shape: f32[128,128], index: 5, kind: input, shape index: {}]
  %s6 = inlined_call_operand.vmem [shape: f32[1,128], index: 6, kind: input, shape index: {}]
  %s7 = inlined_call_operand.vmem [shape: f32[128,128], index: 7, kind: input, shape index: {}]
  %s8 = inlined_call_operand.vmem [shape: f32[1,128], index: 8, kind: input, shape index: {}]
  %s9 = inlined_call_operand.vmem [shape: f32[64,256], index: 9, kind: input, shape index: {}]
  %s10 = inlined_call_operand.vmem [shape: f32[2,8,8,128], index: 10, kind: output, shape index: {}]
  %s11 = sld [smem:[#allocation0]]
  $region73: #{inverted_bottleneck.1} parent=0
    _
  %s13 = ssub.s32 1, %s11
  %s14 = scalar_select 0, %s13, %s11
  loop: start=0, step=1, limit=4
  $region2: #{inverted_bottleneck.1} parent=0 // loop_pre_header
    _
  $region3: #{inverted_bottleneck.1} parent=0 // loop_header
    %s16 = sphi 0, %s20
    %p17 = scmp.ge.s32.totalorder %s16, 4
    %s26 = sphi 0, %s28
    %s29 = sphi 0, %s26
    %s30 = sphi 0, %s29
    %s46 = sphi 0, %s30
    %s50 = sphi 0, %s50
    %s52 = sphi 0, %s50
    %s53 = sphi 0, %s52
    %s67 = sphi 0, %s53
    %s71 = sphi 0, %s71
    %s73 = sphi 0, %s71
    %s74 = sphi 0, %s73
    %s88 = sphi 0, %s74
    %s92 = sphi 0, %s92
    %s94 = sphi 0, %s92
    %s95 = sphi 0, %s94
    %s109 = sphi 0, %s95
    %s113 = sphi 0, %s113
    %s115 = sphi 0, %s113
    %s116 = sphi 0, %s115
    %s130 = sphi 0, %s116
    %s134 = sphi 0, %s134
    %s136 = sphi 0, %s134
    %s137 = sphi 0, %s136
    %s151 = sphi 0, %s137
    %s155 = sphi 0, %s155
    %s157 = sphi 0, %s155
    %s158 = sphi 0, %s157
    %s172 = sphi 0, %s158
    %s176 = sphi 0, %s176
    %s178 = sphi 0, %s176
    %s179 = sphi 0, %s178
    %s193 = sphi 0, %s179
    %s197 = sphi 0, %s197
    %s199 = sphi 0, %s197
    %s200 = sphi 0, %s199
    %s214 = sphi 0, %s200
    %s218 = sphi 0, %s218
    %s220 = sphi 0, %s218
    %s221 = sphi 0, %s220
    %s235 = sphi 0, %s221
    %s241 = sphi 0, %s243
    %s244 = sphi 0, %s241
    %s245 = sphi 0, %s244
    %s261 = sphi 0, %s245
  $region4: #{inverted_bottleneck.1} parent=0 // loop_header_branch
    %19 = sbr.rel (%p17) target = $region8
  $region5: #{inverted_bottleneck.1} parent=0 // loop_body
    %s21 = ssub.s32 %s16, 1
    %s22 = ssub.s32 %s16, 2
    %s23 = sadd.s32 %s16, 1
    %s24 = ssub.s32 %s16, %s23
    %p25 = scmp.eq.s32.totalorder %s24, 0
    %s27 = sadd.s32 %s26, 1
    %s28 = scalar_select %p25, %s26, %s27
    %p31 = pneg %p25
    %p32 = scmp.eq.s32.totalorder %s16, 1
    %p33 = por %p31, %p32
    %p34 = scmp.ne.s32.totalorder %s26, %s29
    %p35 = scmp.eq.s32.totalorder %s16, 0
    %p36 = por %p34, %p35
    %p37 = scmp.ne.s32.totalorder %s26, %s29
    %p38 = scmp.eq.s32.totalorder %s21, 1
    %p39 = por %p37, %p38
    %p40 = scmp.ne.s32.totalorder %s29, %s30
    %p41 = scmp.eq.s32.totalorder %s21, 0
    %p42 = por %p40, %p41
    %p43 = scmp.ne.s32.totalorder %s29, %s30
    %p44 = scmp.eq.s32.totalorder %s22, 1
    %p45 = por %p43, %p44
    %p47 = scmp.ne.s32.totalorder %s30, %s46
    %p48 = scmp.eq.s32.totalorder %s22, 0
    %p49 = por %p47, %p48
    %s51 = sadd.s32 %s50, 1
    %p54 = scmp.eq.s32.totalorder %s16, 1
    %p55 = scmp.ne.s32.totalorder %s50, %s52
    %p56 = scmp.eq.s32.totalorder %s16, 0
    %p57 = por %p55, %p56
    %p58 = scmp.ne.s32.totalorder %s50, %s52
    %p59 = scmp.eq.s32.totalorder %s21, 1
    %p60 = por %p58, %p59
    %p61 = scmp.ne.s32.totalorder %s52, %s53
    %p62 = scmp.eq.s32.totalorder %s21, 0
    %p63 = por %p61, %p62
    %p64 = scmp.ne.s32.totalorder %s52, %s53
    %p65 = scmp.eq.s32.totalorder %s22, 1
    %p66 = por %p64, %p65
    %p68 = scmp.ne.s32.totalorder %s53, %s67
    %p69 = scmp.eq.s32.totalorder %s22, 0
    %p70 = por %p68, %p69
    %s72 = sadd.s32 %s71, 1
    %p75 = scmp.eq.s32.totalorder %s16, 1
    %p76 = scmp.ne.s32.totalorder %s71, %s73
    %p77 = scmp.eq.s32.totalorder %s16, 0
    %p78 = por %p76, %p77
    %p79 = scmp.ne.s32.totalorder %s71, %s73
    %p80 = scmp.eq.s32.totalorder %s21, 1
    %p81 = por %p79, %p80
    %p82 = scmp.ne.s32.totalorder %s73, %s74
    %p83 = scmp.eq.s32.totalorder %s21, 0
    %p84 = por %p82, %p83
    %p85 = scmp.ne.s32.totalorder %s73, %s74
    %p86 = scmp.eq.s32.totalorder %s22, 1
    %p87 = por %p85, %p86
    %p89 = scmp.ne.s32.totalorder %s74, %s88
    %p90 = scmp.eq.s32.totalorder %s22, 0
    %p91 = por %p89, %p90
    %s93 = sadd.s32 %s92, 1
    %p96 = scmp.eq.s32.totalorder %s16, 1
    %p97 = scmp.ne.s32.totalorder %s92, %s94
    %p98 = scmp.eq.s32.totalorder %s16, 0
    %p99 = por %p97, %p98
    %p100 = scmp.ne.s32.totalorder %s92, %s94
    %p101 = scmp.eq.s32.totalorder %s21, 1
    %p102 = por %p100, %p101
    %p103 = scmp.ne.s32.totalorder %s94, %s95
    %p104 = scmp.eq.s32.totalorder %s21, 0
    %p105 = por %p103, %p104
    %p106 = scmp.ne.s32.totalorder %s94, %s95
    %p107 = scmp.eq.s32.totalorder %s22, 1
    %p108 = por %p106, %p107
    %p110 = scmp.ne.s32.totalorder %s95, %s109
    %p111 = scmp.eq.s32.totalorder %s22, 0
    %p112 = por %p110, %p111
    %s114 = sadd.s32 %s113, 1
    %p117 = scmp.eq.s32.totalorder %s16, 1
    %p118 = scmp.ne.s32.totalorder %s113, %s115
    %p119 = scmp.eq.s32.totalorder %s16, 0
    %p120 = por %p118, %p119
    %p121 = scmp.ne.s32.totalorder %s113, %s115
    %p122 = scmp.eq.s32.totalorder %s21, 1
    %p123 = por %p121, %p122
    %p124 = scmp.ne.s32.totalorder %s115, %s116
    %p125 = scmp.eq.s32.totalorder %s21, 0
    %p126 = por %p124, %p125
    %p127 = scmp.ne.s32.totalorder %s115, %s116
    %p128 = scmp.eq.s32.totalorder %s22, 1
    %p129 = por %p127, %p128
    %p131 = scmp.ne.s32.totalorder %s116, %s130
    %p132 = scmp.eq.s32.totalorder %s22, 0
    %p133 = por %p131, %p132
    %s135 = sadd.s32 %s134, 1
    %p138 = scmp.eq.s32.totalorder %s16, 1
    %p139 = scmp.ne.s32.totalorder %s134, %s136
    %p140 = scmp.eq.s32.totalorder %s16, 0
    %p141 = por %p139, %p140
    %p142 = scmp.ne.s32.totalorder %s134, %s136
    %p143 = scmp.eq.s32.totalorder %s21, 1
    %p144 = por %p142, %p143
    %p145 = scmp.ne.s32.totalorder %s136, %s137
    %p146 = scmp.eq.s32.totalorder %s21, 0
    %p147 = por %p145, %p146
    %p148 = scmp.ne.s32.totalorder %s136, %s137
    %p149 = scmp.eq.s32.totalorder %s22, 1
    %p150 = por %p148, %p149
    %p152 = scmp.ne.s32.totalorder %s137, %s151
    %p153 = scmp.eq.s32.totalorder %s22, 0
    %p154 = por %p152, %p153
    %s156 = sadd.s32 %s155, 1
    %p159 = scmp.eq.s32.totalorder %s16, 1
    %p160 = scmp.ne.s32.totalorder %s155, %s157
    %p161 = scmp.eq.s32.totalorder %s16, 0
    %p162 = por %p160, %p161
    %p163 = scmp.ne.s32.totalorder %s155, %s157
    %p164 = scmp.eq.s32.totalorder %s21, 1
    %p165 = por %p163, %p164
    %p166 = scmp.ne.s32.totalorder %s157, %s158
    %p167 = scmp.eq.s32.totalorder %s21, 0
    %p168 = por %p166, %p167
    %p169 = scmp.ne.s32.totalorder %s157, %s158
    %p170 = scmp.eq.s32.totalorder %s22, 1
    %p171 = por %p169, %p170
    %p173 = scmp.ne.s32.totalorder %s158, %s172
    %p174 = scmp.eq.s32.totalorder %s22, 0
    %p175 = por %p173, %p174
    %s177 = sadd.s32 %s176, 1
    %p180 = scmp.eq.s32.totalorder %s16, 1
    %p181 = scmp.ne.s32.totalorder %s176, %s178
    %p182 = scmp.eq.s32.totalorder %s16, 0
    %p183 = por %p181, %p182
    %p184 = scmp.ne.s32.totalorder %s176, %s178
    %p185 = scmp.eq.s32.totalorder %s21, 1
    %p186 = por %p184, %p185
    %p187 = scmp.ne.s32.totalorder %s178, %s179
    %p188 = scmp.eq.s32.totalorder %s21, 0
    %p189 = por %p187, %p188
    %p190 = scmp.ne.s32.totalorder %s178, %s179
    %p191 = scmp.eq.s32.totalorder %s22, 1
    %p192 = por %p190, %p191
    %p194 = scmp.ne.s32.totalorder %s179, %s193
    %p195 = scmp.eq.s32.totalorder %s22, 0
    %p196 = por %p194, %p195
    %s198 = sadd.s32 %s197, 1
    %p201 = scmp.eq.s32.totalorder %s16, 1
    %p202 = scmp.ne.s32.totalorder %s197, %s199
    %p203 = scmp.eq.s32.totalorder %s16, 0
    %p204 = por %p202, %p203
    %p205 = scmp.ne.s32.totalorder %s197, %s199
    %p206 = scmp.eq.s32.totalorder %s21, 1
    %p207 = por %p205, %p206
    %p208 = scmp.ne.s32.totalorder %s199, %s200
    %p209 = scmp.eq.s32.totalorder %s21, 0
    %p210 = por %p208, %p209
    %p211 = scmp.ne.s32.totalorder %s199, %s200
    %p212 = scmp.eq.s32.totalorder %s22, 1
    %p213 = por %p211, %p212
    %p215 = scmp.ne.s32.totalorder %s200, %s214
    %p216 = scmp.eq.s32.totalorder %s22, 0
    %p217 = por %p215, %p216
    %s219 = sadd.s32 %s218, 1
    %p222 = scmp.eq.s32.totalorder %s16, 1
    %p223 = scmp.ne.s32.totalorder %s218, %s220
    %p224 = scmp.eq.s32.totalorder %s16, 0
    %p225 = por %p223, %p224
    %p226 = scmp.ne.s32.totalorder %s218, %s220
    %p227 = scmp.eq.s32.totalorder %s21, 1
    %p228 = por %p226, %p227
    %p229 = scmp.ne.s32.totalorder %s220, %s221
    %p230 = scmp.eq.s32.totalorder %s21, 0
    %p231 = por %p229, %p230
    %p232 = scmp.ne.s32.totalorder %s220, %s221
    %p233 = scmp.eq.s32.totalorder %s22, 1
    %p234 = por %p232, %p233
    %p236 = scmp.ne.s32.totalorder %s221, %s235
    %p237 = scmp.eq.s32.totalorder %s22, 0
    %p238 = por %p236, %p237
    %s239 = ssub.s32 %s16, %s23
    %p240 = scmp.eq.s32.totalorder %s239, 0
    %s242 = sadd.s32 %s241, 1
    %s243 = scalar_select %p240, %s241, %s242
    %p246 = pneg %p240
    %p247 = scmp.eq.s32.totalorder %s16, 1
    %p248 = por %p246, %p247
    %p249 = scmp.ne.s32.totalorder %s241, %s244
    %p250 = scmp.eq.s32.totalorder %s16, 0
    %p251 = por %p249, %p250
    %p252 = scmp.ne.s32.totalorder %s241, %s244
    %p253 = scmp.eq.s32.totalorder %s21, 1
    %p254 = por %p252, %p253
    %p255 = scmp.ne.s32.totalorder %s244, %s245
    %p256 = scmp.eq.s32.totalorder %s21, 0
    %p257 = por %p255, %p256
    %p258 = scmp.ne.s32.totalorder %s244, %s245
    %p259 = scmp.eq.s32.totalorder %s22, 1
    %p260 = por %p258, %p259
    %p262 = scmp.ne.s32.totalorder %s245, %s261
    %p263 = scmp.eq.s32.totalorder %s22, 0
    %p264 = por %p262, %p263
    %p265 = scmp.le.s32.totalorder 1, %s16
    %p266 = scmp.lt.s32.totalorder %s16, 3
    %p267 = pnand %p265, %p266
    %p268 = pneg %p267
    // Predicated region
    $region9: #{inverted_bottleneck.1} parent=5 // pred_check
      _
    $region10: #{inverted_bottleneck.1} parent=5 // pred_check_branch
      %270 = sbr.rel (%p267) target = $region12
    $region11: #{inverted_bottleneck.1} parent=5 // pred_region
      %s271 = ssub.s32 %s16, 1
      // Predicated region
      $region13: #{inverted_bottleneck.1} parent=11 // pred_check
        %p272 = pneg %p63
      $region14: #{inverted_bottleneck.1} parent=11 // pred_check_branch
        %274 = sbr.rel (%p272) target = $region16
      $region15: #{inverted_bottleneck.1} parent=11 // pred_region
        _
      $region16: #{inverted_bottleneck.1} parent=11 // pred_fallthru
        _
      // Predicated region
      $region17: #{inverted_bottleneck.1} parent=11 // pred_check
        %p275 = pneg %p84
      $region18: #{inverted_bottleneck.1} parent=11 // pred_check_branch
        %277 = sbr.rel (%p275) target = $region20
      $region19: #{inverted_bottleneck.1} parent=11 // pred_region
        _
      $region20: #{inverted_bottleneck.1} parent=11 // pred_fallthru
        _
      // Predicated region
      $region21: #{inverted_bottleneck.1} parent=11 // pred_check
        %p278 = pneg %p105
      $region22: #{inverted_bottleneck.1} parent=11 // pred_check_branch
        %280 = sbr.rel (%p278) target = $region24
      $region23: #{inverted_bottleneck.1} parent=11 // pred_region
        _
      $region24: #{inverted_bottleneck.1} parent=11 // pred_fallthru
        _
      // Predicated region
      $region25: #{inverted_bottleneck.1} parent=11 // pred_check
        %p281 = pneg %p126
      $region26: #{inverted_bottleneck.1} parent=11 // pred_check_branch
        %283 = sbr.rel (%p281) target = $region28
      $region27: #{inverted_bottleneck.1} parent=11 // pred_region
        _
      $region28: #{inverted_bottleneck.1} parent=11 // pred_fallthru
        _
      // Predicated region
      $region29: #{inverted_bottleneck.1} parent=11 // pred_check
        %p284 = pneg %p147
      $region30: #{inverted_bottleneck.1} parent=11 // pred_check_branch
        %286 = sbr.rel (%p284) target = $region32
      $region31: #{inverted_bottleneck.1} parent=11 // pred_region
        _
      $region32: #{inverted_bottleneck.1} parent=11 // pred_fallthru
        _
      // Predicated region
      $region33: #{inverted_bottleneck.1} parent=11 // pred_check
        %p287 = pneg %p168
      $region34: #{inverted_bottleneck.1} parent=11 // pred_check_branch
        %289 = sbr.rel (%p287) target = $region36
      $region35: #{inverted_bottleneck.1} parent=11 // pred_region
        _
      $region36: #{inverted_bottleneck.1} parent=11 // pred_fallthru
        _
      // Predicated region
      $region37: #{inverted_bottleneck.1} parent=11 // pred_check
        %p290 = pneg %p189
      $region38: #{inverted_bottleneck.1} parent=11 // pred_check_branch
        %292 = sbr.rel (%p290) target = $region40
      $region39: #{inverted_bottleneck.1} parent=11 // pred_region
        _
      $region40: #{inverted_bottleneck.1} parent=11 // pred_fallthru
        _
      // Predicated region
      $region41: #{inverted_bottleneck.1} parent=11 // pred_check
        %p293 = pneg %p210
      $region42: #{inverted_bottleneck.1} parent=11 // pred_check_branch
        %295 = sbr.rel (%p293) target = $region44
      $region43: #{inverted_bottleneck.1} parent=11 // pred_region
        _
      $region44: #{inverted_bottleneck.1} parent=11 // pred_fallthru
        _
      // Predicated region
      $region45: #{inverted_bottleneck.1} parent=11 // pred_check
        %p296 = pneg %p231
      $region46: #{inverted_bottleneck.1} parent=11 // pred_check_branch
        %298 = sbr.rel (%p296) target = $region48
      $region47: #{inverted_bottleneck.1} parent=11 // pred_region
        _
      $region48: #{inverted_bottleneck.1} parent=11 // pred_fallthru
        _
    $region12: #{inverted_bottleneck.1} parent=5 // pred_fallthru
      _
    %p299 = scmp.lt.s32.totalorder %s16, 2
    // Predicated region
    $region49: #{inverted_bottleneck.1} parent=5 // pred_check
      %p300 = pneg %p299
    $region50: #{inverted_bottleneck.1} parent=5 // pred_check_branch
      %302 = sbr.rel (%p300) target = $region52
    $region51: #{inverted_bottleneck.1} parent=5 // pred_region
      // Predicated region
      $region53: #{inverted_bottleneck.1} parent=51 // pred_check
        %p303 = pneg %p36
      $region54: #{inverted_bottleneck.1} parent=51 // pred_check_branch
        %305 = sbr.rel (%p303) target = $region56
      $region55: #{inverted_bottleneck.1} parent=51 // pred_region
        %p306 = scmp.lt.s32.totalorder %s16, 1
        %s307 = scalar_select %p306, %s16, 1
        %s308 = smul.addr %s307, 32
        %s309 = smul.addr %s308, 8
        %s310 = scalar_lea.vmem %s0, %s309
      $region56: #{inverted_bottleneck.1} parent=51 // pred_fallthru
        _
    $region52: #{inverted_bottleneck.1} parent=5 // pred_fallthru
      _
    %p311 = scmp.le.s32.totalorder 1, %s16
    %p312 = scmp.lt.s32.totalorder %s16, 3
    %p313 = pnand %p311, %p312
    %p314 = pneg %p313
    // Predicated region
    $region57: #{inverted_bottleneck.1} parent=5 // pred_check
      _
    $region58: #{inverted_bottleneck.1} parent=5 // pred_check_branch
      %316 = sbr.rel (%p313) target = $region60
    $region59: #{inverted_bottleneck.1} parent=5 // pred_region
      %s317 = ssub.s32 %s16, 1
      %p318 = scmp.lt.s32.totalorder %s21, 1
      %s319 = scalar_select %p318, %s21, 1
      %s320 = smul.addr %s319, 32
      %s321 = smul.addr %s320, 8
      %s322 = scalar_lea.vmem %s0, %s321
      %p323 = pneg %p42
      %p324 = pneg %p39
      %p325 = pneg %p63
      %p326 = pneg %p60
      %p327 = pneg %p84
      %p328 = pneg %p81
      %p329 = pneg %p105
      %p330 = pneg %p102
      %p331 = pneg %p126
      %p332 = pneg %p123
      %p333 = pneg %p147
      %p334 = pneg %p144
      %p335 = pneg %p168
      %p336 = pneg %p165
      %p337 = pneg %p189
      %p338 = pneg %p186
      %p339 = pneg %p210
      %p340 = pneg %p207
      %p341 = pneg %p231
      %p342 = pneg %p228
      %p343 = pneg %p257
      %p344 = pneg %p254
      %p345 = scmp.lt.s32.totalorder %s21, 1
      %s346 = scalar_select %p345, %s21, 1
      %s347 = smul.addr %s346, 8
      %s348 = smul.addr %s347, 8
      %s349 = scalar_lea.vmem %s10, %s348
      %p350 = scmp.lt.s32.totalorder %s21, 1
      %s351 = scalar_select %p350, %s21, 1
      %s352 = smul.addr %s351, 32
      %s353 = smul.addr %s352, 8
      %s354 = scalar_lea.vmem %s0, %s353
      %p355 = scmp.lt.s32.totalorder %s21, 1
      %s356 = scalar_select %p355, %s21, 1
      %s357 = smul.addr %s356, 8
      %s358 = smul.addr %s357, 8
      %s359 = scalar_lea.vmem %s10, %s358
      %360 = vst [vmem:[#allocation2] sm:$0xff] 0.0
      %361 = vst [vmem:[#allocation2 + $0x8] sm:$0xff] 0.0
      %362 = vst [vmem:[#allocation2 + $0x10] sm:$0xff] 0.0
      %363 = vst [vmem:[#allocation2 + $0x18] sm:$0xff] 0.0
      %364 = vst [vmem:[#allocation2 + $0x20] sm:$0xff] 0.0
      %365 = vst [vmem:[#allocation2 + $0x28] sm:$0xff] 0.0
      %366 = vst [vmem:[#allocation2 + $0x30] sm:$0xff] 0.0
      %367 = vst [vmem:[#allocation2 + $0x38] sm:$0xff] 0.0
      %368 = vst [vmem:[#allocation2 + $0x40] sm:$0xff] 0.0
      %369 = vst [vmem:[#allocation2 + $0x48] sm:$0xff] 0.0
      %370 = vst [vmem:[#allocation2 + $0x50] sm:$0xff] 0.0
      %371 = vst [vmem:[#allocation2 + $0x58] sm:$0xff] 0.0
      %372 = vst [vmem:[#allocation2 + $0x60] sm:$0xff] 0.0
      %373 = vst [vmem:[#allocation2 + $0x68] sm:$0xff] 0.0
      %374 = vst [vmem:[#allocation2 + $0x70] sm:$0xff] 0.0
      %375 = vst [vmem:[#allocation2 + $0x78] sm:$0xff] 0.0
      %376 = vst [vmem:[#allocation2 + $0x80] sm:$0xff] 0.0
      %377 = vst [vmem:[#allocation2 + $0x88] sm:$0xff] 0.0
      %378 = vst [vmem:[#allocation2 + $0x90] sm:$0xff] 0.0
      %379 = vst [vmem:[#allocation2 + $0x98] sm:$0xff] 0.0
      %380 = vst [vmem:[#allocation2 + $0xa0] sm:$0xff] 0.0
      %381 = vst [vmem:[#allocation2 + $0xa8] sm:$0xff] 0.0
      %382 = vst [vmem:[#allocation2 + $0xb0] sm:$0xff] 0.0
      %383 = vst [vmem:[#allocation2 + $0xb8] sm:$0xff] 0.0
      %384 = vst [vmem:[#allocation2 + $0xc0] sm:$0xff] 0.0
      %385 = vst [vmem:[#allocation2 + $0xc8] sm:$0xff] 0.0
      %386 = vst [vmem:[#allocation2 + $0xd0] sm:$0xff] 0.0
      %387 = vst [vmem:[#allocation2 + $0xd8] sm:$0xff] 0.0
      %388 = vst [vmem:[#allocation2 + $0xe0] sm:$0xff] 0.0
      %389 = vst [vmem:[#allocation2 + $0xe8] sm:$0xff] 0.0
      %390 = vst [vmem:[#allocation2 + $0xf0] sm:$0xff] 0.0
      %391 = vst [vmem:[#allocation2 + $0xf8] sm:$0xff] 0.0
      %392 = vst [vmem:[#allocation2 + $0x100] sm:$0xff] 0.0
      %393 = vst [vmem:[#allocation2 + $0x108] sm:$0xff] 0.0
      %394 = vst [vmem:[#allocation2 + $0x110] sm:$0xff] 0.0
      %395 = vst [vmem:[#allocation2 + $0x118] sm:$0xff] 0.0
      %396 = vst [vmem:[#allocation2 + $0x120] sm:$0xff] 0.0
      %397 = vst [vmem:[#allocation2 + $0x128] sm:$0xff] 0.0
      %398 = vst [vmem:[#allocation2 + $0x130] sm:$0xff] 0.0
      %399 = vst [vmem:[#allocation2 + $0x138] sm:$0xff] 0.0
      %400 = vst [vmem:[#allocation2 + $0x140] sm:$0xff] 0.0
      %401 = vst [vmem:[#allocation2 + $0x148] sm:$0xff] 0.0
      %402 = vst [vmem:[#allocation2 + $0x150] sm:$0xff] 0.0
      %403 = vst [vmem:[#allocation2 + $0x158] sm:$0xff] 0.0
      %404 = vst [vmem:[#allocation2 + $0x160] sm:$0xff] 0.0
      %405 = vst [vmem:[#allocation2 + $0x168] sm:$0xff] 0.0
      %406 = vst [vmem:[#allocation2 + $0x170] sm:$0xff] 0.0
      %407 = vst [vmem:[#allocation2 + $0x178] sm:$0xff] 0.0
      %408 = vst [vmem:[#allocation2 + $0x180] sm:$0xff] 0.0
      %409 = vst [vmem:[#allocation2 + $0x188] sm:$0xff] 0.0
      %410 = vst [vmem:[#allocation2 + $0x190] sm:$0xff] 0.0
      %411 = vst [vmem:[#allocation2 + $0x198] sm:$0xff] 0.0
      %412 = vst [vmem:[#allocation2 + $0x1a0] sm:$0xff] 0.0
      %413 = vst [vmem:[#allocation2 + $0x1a8] sm:$0xff] 0.0
      %414 = vst [vmem:[#allocation2 + $0x1b0] sm:$0xff] 0.0
      %415 = vst [vmem:[#allocation2 + $0x1b8] sm:$0xff] 0.0
      %416 = vst [vmem:[#allocation2 + $0x1c0] sm:$0xff] 0.0
      %417 = vst [vmem:[#allocation2 + $0x1c8] sm:$0xff] 0.0
      %418 = vst [vmem:[#allocation2 + $0x1d0] sm:$0xff] 0.0
      %419 = vst [vmem:[#allocation2 + $0x1d8] sm:$0xff] 0.0
      %420 = vst [vmem:[#allocation2 + $0x1e0] sm:$0xff] 0.0
      %421 = vst [vmem:[#allocation2 + $0x1e8] sm:$0xff] 0.0
      %422 = vst [vmem:[#allocation2 + $0x1f0] sm:$0xff] 0.0
      %423 = vst [vmem:[#allocation2 + $0x1f8] sm:$0xff] 0.0
      %424 = vst [vmem:[#allocation2 + $0x200] sm:$0xff] 0.0
      %425 = vst [vmem:[#allocation2 + $0x208] sm:$0xff] 0.0
      %426 = vst [vmem:[#allocation2 + $0x210] sm:$0xff] 0.0
      %427 = vst [vmem:[#allocation2 + $0x218] sm:$0xff] 0.0
      %428 = vst [vmem:[#allocation2 + $0x220] sm:$0xff] 0.0
      %429 = vst [vmem:[#allocation2 + $0x228] sm:$0xff] 0.0
      %430 = vst [vmem:[#allocation2 + $0x230] sm:$0xff] 0.0
      %431 = vst [vmem:[#allocation2 + $0x238] sm:$0xff] 0.0
      %v432 = vld [vmem:[%s354] sm:$0xff]
      %v433 = vld [vmem:[%s354 + $0x8] sm:$0xff]
      %v434 = vld [vmem:[%s354 + $0x10] sm:$0xff]
      %v435 = vld [vmem:[%s354 + $0x18] sm:$0xff]
      %v436 = vld [vmem:[%s354 + $0x20] sm:$0xff]
      %v437 = vld [vmem:[%s354 + $0x28] sm:$0xff]
      %v438 = vld [vmem:[%s354 + $0x30] sm:$0xff]
      %v439 = vld [vmem:[%s354 + $0x38] sm:$0xff]
      %v440 = vld [vmem:[%s354 + $0x40] sm:$0xff]
      %v441 = vld [vmem:[%s354 + $0x48] sm:$0xff]
      %v442 = vld [vmem:[%s354 + $0x50] sm:$0xff]
      %v443 = vld [vmem:[%s354 + $0x58] sm:$0xff]
      %v444 = vld [vmem:[%s354 + $0x60] sm:$0xff]
      %v445 = vld [vmem:[%s354 + $0x68] sm:$0xff]
      %v446 = vld [vmem:[%s354 + $0x70] sm:$0xff]
      %v447 = vld [vmem:[%s354 + $0x78] sm:$0xff]
      %v448 = vld [vmem:[%s354 + $0x80] sm:$0xff]
      %v449 = vld [vmem:[%s354 + $0x88] sm:$0xff]
      %v450 = vld [vmem:[%s354 + $0x90] sm:$0xff]
      %v451 = vld [vmem:[%s354 + $0x98] sm:$0xff]
      %v452 = vld [vmem:[%s354 + $0xa0] sm:$0xff]
      %v453 = vld [vmem:[%s354 + $0xa8] sm:$0xff]
      %v454 = vld [vmem:[%s354 + $0xb0] sm:$0xff]
      %v455 = vld [vmem:[%s354 + $0xb8] sm:$0xff]
      %v456 = vld [vmem:[%s354 + $0xc0] sm:$0xff]
      %v457 = vld [vmem:[%s354 + $0xc8] sm:$0xff]
      %v458 = vld [vmem:[%s354 + $0xd0] sm:$0xff]
      %v459 = vld [vmem:[%s354 + $0xd8] sm:$0xff]
      %v460 = vld [vmem:[%s354 + $0xe0] sm:$0xff]
      %v461 = vld [vmem:[%s354 + $0xe8] sm:$0xff]
      %v462 = vld [vmem:[%s354 + $0xf0] sm:$0xff]
      %v463 = vld [vmem:[%s354 + $0xf8] sm:$0xff]
      %v464 = vld [vmem:[%s1] sm:$0xff]
      %v465 = vld [vmem:[%s1 + $0x8] sm:$0xff]
      %v466 = vld [vmem:[%s1 + $0x10] sm:$0xff]
      %v467 = vld [vmem:[%s1 + $0x18] sm:$0xff]
      %v468 = vld [vmem:[%s1 + $0x20] sm:$0xff]
      %v469 = vld [vmem:[%s1 + $0x28] sm:$0xff]
      %v470 = vld [vmem:[%s1 + $0x30] sm:$0xff]
      %v471 = vld [vmem:[%s1 + $0x38] sm:$0xff]
      %v472 = vld [vmem:[%s1 + $0x40] sm:$0xff]
      %v473 = vld [vmem:[%s1 + $0x48] sm:$0xff]
      %v474 = vld [vmem:[%s1 + $0x50] sm:$0xff]
      %v475 = vld [vmem:[%s1 + $0x58] sm:$0xff]
      %v476 = vld [vmem:[%s1 + $0x60] sm:$0xff]
      %v477 = vld [vmem:[%s1 + $0x68] sm:$0xff]
      %v478 = vld [vmem:[%s1 + $0x70] sm:$0xff]
      %v479 = vld [vmem:[%s1 + $0x78] sm:$0xff]
      %v480 = vld [vmem:[%s2] sm:$0x1]
      %v482 = vperm.slane %v480, 0
      %484 = vmatpush.msra.mxu0 %v479
      %485 = vmatpush.msra.mxu0 %v478
      %486 = vmatpush.msra.mxu0 %v477
      %487 = vmatpush.msra.mxu0 %v476
      %488 = vmatpush.msra.mxu0 %v475
      %489 = vmatpush.msra.mxu0 %v474
      %490 = vmatpush.msra.mxu0 %v473
      %491 = vmatpush.msra.mxu0 %v472
      %492 = vmatpush.msra.mxu0 %v471
      %493 = vmatpush.msra.mxu0 %v470
      %494 = vmatpush.msra.mxu0 %v469
      %495 = vmatpush.msra.mxu0 %v468
      %496 = vmatpush.msra.mxu0 %v467
      %497 = vmatpush.msra.mxu0 %v466
      %498 = vmatpush.msra.mxu0 %v465
      %499 = vmatpush.msra.mxu0 %v464
      %500 = vmatmul.f32.gmra.mxu0 %v432
      %v501 = vpop.f32.mrf.mxu0
      %v502 = vadd.f32 %v482, %v501
      %503 = vmatmul.f32.gmra.mxu0 %v433
      %v504 = vpop.f32.mrf.mxu0
      %v505 = vadd.f32 %v482, %v504
      %506 = vmatmul.f32.gmra.mxu0 %v434
      %v507 = vpop.f32.mrf.mxu0
      %v508 = vadd.f32 %v482, %v507
      %509 = vmatmul.f32.gmra.mxu0 %v435
      %v510 = vpop.f32.mrf.mxu0
      %v511 = vadd.f32 %v482, %v510
      %512 = vmatmul.f32.gmra.mxu0 %v436
      %v513 = vpop.f32.mrf.mxu0
      %v514 = vadd.f32 %v482, %v513
      %515 = vmatmul.f32.gmra.mxu0 %v437
      %v516 = vpop.f32.mrf.mxu0
      %v517 = vadd.f32 %v482, %v516
      %518 = vmatmul.f32.gmra.mxu0 %v438
      %v519 = vpop.f32.mrf.mxu0
      %v520 = vadd.f32 %v482, %v519
      %521 = vmatmul.f32.gmra.mxu0 %v439
      %v522 = vpop.f32.mrf.mxu0
      %v523 = vadd.f32 %v482, %v522
      %524 = vmatmul.f32.gmra.mxu0 %v440
      %v525 = vpop.f32.mrf.mxu0
      %v526 = vadd.f32 %v482, %v525
      %527 = vmatmul.f32.gmra.mxu0 %v441
      %v528 = vpop.f32.mrf.mxu0
      %v529 = vadd.f32 %v482, %v528
      %530 = vmatmul.f32.gmra.mxu0 %v442
      %v531 = vpop.f32.mrf.mxu0
      %v532 = vadd.f32 %v482, %v531
      %533 = vmatmul.f32.gmra.mxu0 %v443
      %v534 = vpop.f32.mrf.mxu0
      %v535 = vadd.f32 %v482, %v534
      %536 = vmatmul.f32.gmra.mxu0 %v444
      %v537 = vpop.f32.mrf.mxu0
      %v538 = vadd.f32 %v482, %v537
      %539 = vmatmul.f32.gmra.mxu0 %v445
      %v540 = vpop.f32.mrf.mxu0
      %v541 = vadd.f32 %v482, %v540
      %542 = vmatmul.f32.gmra.mxu0 %v446
      %v543 = vpop.f32.mrf.mxu0
      %v544 = vadd.f32 %v482, %v543
      %545 = vmatmul.f32.gmra.mxu0 %v447
      %v546 = vpop.f32.mrf.mxu0
      %v547 = vadd.f32 %v482, %v546
      %548 = vmatmul.f32.gmra.mxu0 %v448
      %v549 = vpop.f32.mrf.mxu0
      %v550 = vadd.f32 %v482, %v549
      %551 = vmatmul.f32.gmra.mxu0 %v449
      %v552 = vpop.f32.mrf.mxu0
      %v553 = vadd.f32 %v482, %v552
      %554 = vmatmul.f32.gmra.mxu0 %v450
      %v555 = vpop.f32.mrf.mxu0
      %v556 = vadd.f32 %v482, %v555
      %557 = vmatmul.f32.gmra.mxu0 %v451
      %v558 = vpop.f32.mrf.mxu0
      %v559 = vadd.f32 %v482, %v558
      %560 = vmatmul.f32.gmra.mxu0 %v452
      %v561 = vpop.f32.mrf.mxu0
      %v562 = vadd.f32 %v482, %v561
      %563 = vmatmul.f32.gmra.mxu0 %v453
      %v564 = vpop.f32.mrf.mxu0
      %v565 = vadd.f32 %v482, %v564
      %566 = vmatmul.f32.gmra.mxu0 %v454
      %v567 = vpop.f32.mrf.mxu0
      %v568 = vadd.f32 %v482, %v567
      %569 = vmatmul.f32.gmra.mxu0 %v455
      %v570 = vpop.f32.mrf.mxu0
      %v571 = vadd.f32 %v482, %v570
      %572 = vmatmul.f32.gmra.mxu0 %v456
      %v573 = vpop.f32.mrf.mxu0
      %v574 = vadd.f32 %v482, %v573
      %575 = vmatmul.f32.gmra.mxu0 %v457
      %v576 = vpop.f32.mrf.mxu0
      %v577 = vadd.f32 %v482, %v576
      %578 = vmatmul.f32.gmra.mxu0 %v458
      %v579 = vpop.f32.mrf.mxu0
      %v580 = vadd.f32 %v482, %v579
      %581 = vmatmul.f32.gmra.mxu0 %v459
      %v582 = vpop.f32.mrf.mxu0
      %v583 = vadd.f32 %v482, %v582
      %584 = vmatmul.f32.gmra.mxu0 %v460
      %v585 = vpop.f32.mrf.mxu0
      %v586 = vadd.f32 %v482, %v585
      %587 = vmatmul.f32.gmra.mxu0 %v461
      %v588 = vpop.f32.mrf.mxu0
      %v589 = vadd.f32 %v482, %v588
      %590 = vmatmul.f32.gmra.mxu0 %v462
      %v591 = vpop.f32.mrf.mxu0
      %v592 = vadd.f32 %v482, %v591
      %593 = vmatmul.f32.gmra.mxu0 %v463
      %v594 = vpop.f32.mrf.mxu0
      %v595 = vadd.f32 %v482, %v594
      %596 = vdwg.mxu0
      %vm597 = vcmp.gt.f32.partialorder %v502, 0.0
      %vm598 = vcmp.gt.f32.partialorder %v505, 0.0
      %vm599 = vcmp.gt.f32.partialorder %v508, 0.0
      %vm600 = vcmp.gt.f32.partialorder %v511, 0.0
      %vm601 = vcmp.gt.f32.partialorder %v514, 0.0
      %vm602 = vcmp.gt.f32.partialorder %v517, 0.0
      %vm603 = vcmp.gt.f32.partialorder %v520, 0.0
      %vm604 = vcmp.gt.f32.partialorder %v523, 0.0
      %vm605 = vcmp.gt.f32.partialorder %v526, 0.0
      %vm606 = vcmp.gt.f32.partialorder %v529, 0.0
      %vm607 = vcmp.gt.f32.partialorder %v532, 0.0
      %vm608 = vcmp.gt.f32.partialorder %v535, 0.0
      %vm609 = vcmp.gt.f32.partialorder %v538, 0.0
      %vm610 = vcmp.gt.f32.partialorder %v541, 0.0
      %vm611 = vcmp.gt.f32.partialorder %v544, 0.0
      %vm612 = vcmp.gt.f32.partialorder %v547, 0.0
      %vm613 = vcmp.gt.f32.partialorder %v550, 0.0
      %vm614 = vcmp.gt.f32.partialorder %v553, 0.0
      %vm615 = vcmp.gt.f32.partialorder %v556, 0.0
      %vm616 = vcmp.gt.f32.partialorder %v559, 0.0
      %vm617 = vcmp.gt.f32.partialorder %v562, 0.0
      %vm618 = vcmp.gt.f32.partialorder %v565, 0.0
      %vm619 = vcmp.gt.f32.partialorder %v568, 0.0
      %vm620 = vcmp.gt.f32.partialorder %v571, 0.0
      %vm621 = vcmp.gt.f32.partialorder %v574, 0.0
      %vm622 = vcmp.gt.f32.partialorder %v577, 0.0
      %vm623 = vcmp.gt.f32.partialorder %v580, 0.0
      %vm624 = vcmp.gt.f32.partialorder %v583, 0.0
      %vm625 = vcmp.gt.f32.partialorder %v586, 0.0
      %vm626 = vcmp.gt.f32.partialorder %v589, 0.0
      %vm627 = vcmp.gt.f32.partialorder %v592, 0.0
      %vm628 = vcmp.gt.f32.partialorder %v595, 0.0
      %v629 = vmul.f32 %v502, 0.01
      %v630 = vmul.f32 %v505, 0.01
      %v631 = vmul.f32 %v508, 0.01
      %v632 = vmul.f32 %v511, 0.01
      %v633 = vmul.f32 %v514, 0.01
      %v634 = vmul.f32 %v517, 0.01
      %v635 = vmul.f32 %v520, 0.01
      %v636 = vmul.f32 %v523, 0.01
      %v637 = vmul.f32 %v526, 0.01
      %v638 = vmul.f32 %v529, 0.01
      %v639 = vmul.f32 %v532, 0.01
      %v640 = vmul.f32 %v535, 0.01
      %v641 = vmul.f32 %v538, 0.01
      %v642 = vmul.f32 %v541, 0.01
      %v643 = vmul.f32 %v544, 0.01
      %v644 = vmul.f32 %v547, 0.01
      %v645 = vmul.f32 %v550, 0.01
      %v646 = vmul.f32 %v553, 0.01
      %v647 = vmul.f32 %v556, 0.01
      %v648 = vmul.f32 %v559, 0.01
      %v649 = vmul.f32 %v562, 0.01
      %v650 = vmul.f32 %v565, 0.01
      %v651 = vmul.f32 %v568, 0.01
      %v652 = vmul.f32 %v571, 0.01
      %v653 = vmul.f32 %v574, 0.01
      %v654 = vmul.f32 %v577, 0.01
      %v655 = vmul.f32 %v580, 0.01
      %v656 = vmul.f32 %v583, 0.01
      %v657 = vmul.f32 %v586, 0.01
      %v658 = vmul.f32 %v589, 0.01
      %v659 = vmul.f32 %v592, 0.01
      %v660 = vmul.f32 %v595, 0.01
      %v661 = vsel %vm597, %v502, %v629
      %v662 = vsel %vm598, %v505, %v630
      %v663 = vsel %vm599, %v508, %v631
      %v664 = vsel %vm600, %v511, %v632
      %v665 = vsel %vm601, %v514, %v633
      %v666 = vsel %vm602, %v517, %v634
      %v667 = vsel %vm603, %v520, %v635
      %v668 = vsel %vm604, %v523, %v636
      %v669 = vsel %vm605, %v526, %v637
      %v670 = vsel %vm606, %v529, %v638
      %v671 = vsel %vm607, %v532, %v639
      %v672 = vsel %vm608, %v535, %v640
      %v673 = vsel %vm609, %v538, %v641
      %v674 = vsel %vm610, %v541, %v642
      %v675 = vsel %vm611, %v544, %v643
      %v676 = vsel %vm612, %v547, %v644
      %v677 = vsel %vm613, %v550, %v645
      %v678 = vsel %vm614, %v553, %v646
      %v679 = vsel %vm615, %v556, %v647
      %v680 = vsel %vm616, %v559, %v648
      %v681 = vsel %vm617, %v562, %v649
      %v682 = vsel %vm618, %v565, %v650
      %v683 = vsel %vm619, %v568, %v651
      %v684 = vsel %vm620, %v571, %v652
      %v685 = vsel %vm621, %v574, %v653
      %v686 = vsel %vm622, %v577, %v654
      %v687 = vsel %vm623, %v580, %v655
      %v688 = vsel %vm624, %v583, %v656
      %v689 = vsel %vm625, %v586, %v657
      %v690 = vsel %vm626, %v589, %v658
      %v691 = vsel %vm627, %v592, %v659
      %v692 = vsel %vm628, %v595, %v660
      %s693 = scalar_lea.vmem [#allocation2], 32
      %694 = vst [vmem:[%s693 + $0x8] sm:$0xff] %v661
      %695 = vst [vmem:[%s693 + $0x10] sm:$0xff] %v662
      %696 = vst [vmem:[%s693 + $0x28] sm:$0xff] %v663
      %697 = vst [vmem:[%s693 + $0x30] sm:$0xff] %v664
      %698 = vst [vmem:[%s693 + $0x48] sm:$0xff] %v665
      %699 = vst [vmem:[%s693 + $0x50] sm:$0xff] %v666
      %700 = vst [vmem:[%s693 + $0x68] sm:$0xff] %v667
      %701 = vst [vmem:[%s693 + $0x70] sm:$0xff] %v668
      %702 = vst [vmem:[%s693 + $0x88] sm:$0xff] %v669
      %703 = vst [vmem:[%s693 + $0x90] sm:$0xff] %v670
      %704 = vst [vmem:[%s693 + $0xa8] sm:$0xff] %v671
      %705 = vst [vmem:[%s693 + $0xb0] sm:$0xff] %v672
      %706 = vst [vmem:[%s693 + $0xc8] sm:$0xff] %v673
      %707 = vst [vmem:[%s693 + $0xd0] sm:$0xff] %v674
      %708 = vst [vmem:[%s693 + $0xe8] sm:$0xff] %v675
      %709 = vst [vmem:[%s693 + $0xf0] sm:$0xff] %v676
      %710 = vst [vmem:[%s693 + $0x108] sm:$0xff] %v677
      %711 = vst [vmem:[%s693 + $0x110] sm:$0xff] %v678
      %712 = vst [vmem:[%s693 + $0x128] sm:$0xff] %v679
      %713 = vst [vmem:[%s693 + $0x130] sm:$0xff] %v680
      %714 = vst [vmem:[%s693 + $0x148] sm:$0xff] %v681
      %715 = vst [vmem:[%s693 + $0x150] sm:$0xff] %v682
      %716 = vst [vmem:[%s693 + $0x168] sm:$0xff] %v683
      %717 = vst [vmem:[%s693 + $0x170] sm:$0xff] %v684
      %718 = vst [vmem:[%s693 + $0x188] sm:$0xff] %v685
      %719 = vst [vmem:[%s693 + $0x190] sm:$0xff] %v686
      %720 = vst [vmem:[%s693 + $0x1a8] sm:$0xff] %v687
      %721 = vst [vmem:[%s693 + $0x1b0] sm:$0xff] %v688
      %722 = vst [vmem:[%s693 + $0x1c8] sm:$0xff] %v689
      %723 = vst [vmem:[%s693 + $0x1d0] sm:$0xff] %v690
      %724 = vst [vmem:[%s693 + $0x1e8] sm:$0xff] %v691
      %725 = vst [vmem:[%s693 + $0x1f0] sm:$0xff] %v692
      %v726 = vld [vmem:[%s3] sm:$0x7]
      %v727 = vld [vmem:[%s3 + $0x4] sm:$0x7]
      %v728 = vld [vmem:[%s3 + $0x8] sm:$0x7]
      %v729 = vld [vmem:[#allocation2 + $0x7] sm:$0xff]
      %v730 = vld [vmem:[#allocation2 + $0xf] sm:$0xff]
      %v731 = vld [vmem:[#allocation2 + $0x27] sm:$0xff]
      %v732 = vld [vmem:[#allocation2 + $0x2f] sm:$0xff]
      %v733 = vld [vmem:[#allocation2 + $0x47] sm:$0xff]
      %v734 = vld [vmem:[#allocation2 + $0x4f] sm:$0xff]
      %v735 = vld [vmem:[#allocation2 + $0x67] sm:$0xff]
      %v736 = vld [vmem:[#allocation2 + $0x6f] sm:$0xff]
      %v737 = vld [vmem:[#allocation2 + $0x87] sm:$0xff]
      %v738 = vld [vmem:[#allocation2 + $0x8f] sm:$0xff]
      %v739 = vld [vmem:[#allocation2 + $0xa7] sm:$0xff]
      %v740 = vld [vmem:[#allocation2 + $0xaf] sm:$0xff]
      %v741 = vld [vmem:[#allocation2 + $0xc7] sm:$0xff]
      %v742 = vld [vmem:[#allocation2 + $0xcf] sm:$0xff]
      %v743 = vld [vmem:[#allocation2 + $0xe7] sm:$0xff]
      %v744 = vld [vmem:[#allocation2 + $0xef] sm:$0xff]
      %v745 = vld [vmem:[#allocation2 + $0x107] sm:$0xff]
      %v746 = vld [vmem:[#allocation2 + $0x10f] sm:$0xff]
      %v747 = vld [vmem:[#allocation2 + $0x127] sm:$0xff]
      %v748 = vld [vmem:[#allocation2 + $0x12f] sm:$0xff]
      %v749 = vld [vmem:[#allocation2 + $0x147] sm:$0xff]
      %v750 = vld [vmem:[#allocation2 + $0x14f] sm:$0xff]
      %v751 = vld [vmem:[#allocation2 + $0x167] sm:$0xff]
      %v752 = vld [vmem:[#allocation2 + $0x16f] sm:$0xff]
      %v753 = vld [vmem:[#allocation2 + $0x187] sm:$0xff]
      %v754 = vld [vmem:[#allocation2 + $0x18f] sm:$0xff]
      %v755 = vld [vmem:[#allocation2 + $0x1a7] sm:$0xff]
      %v756 = vld [vmem:[#allocation2 + $0x1af] sm:$0xff]
      %v757 = vld [vmem:[#allocation2 + $0x1c7] sm:$0xff]
      %v758 = vld [vmem:[#allocation2 + $0x1cf] sm:$0xff]
      %v759 = vld [vmem:[#allocation2 + $0x1e7] sm:$0xff]
      %v760 = vld [vmem:[#allocation2 + $0x1ef] sm:$0xff]
      %v761 = vperm.slane %v726, 0
      %v762 = vmul.f32 %v729, %v761
      %v763 = vmul.f32 %v730, %v761
      %v764 = vmul.f32 %v731, %v761
      %v765 = vmul.f32 %v732, %v761
      %v766 = vmul.f32 %v733, %v761
      %v767 = vmul.f32 %v734, %v761
      %v768 = vmul.f32 %v735, %v761
      %v769 = vmul.f32 %v736, %v761
      %v770 = vmul.f32 %v737, %v761
      %v771 = vmul.f32 %v738, %v761
      %v772 = vmul.f32 %v739, %v761
      %v773 = vmul.f32 %v740, %v761
      %v774 = vmul.f32 %v741, %v761
      %v775 = vmul.f32 %v742, %v761
      %v776 = vmul.f32 %v743, %v761
      %v777 = vmul.f32 %v744, %v761
      %v778 = vmul.f32 %v745, %v761
      %v779 = vmul.f32 %v746, %v761
      %v780 = vmul.f32 %v747, %v761
      %v781 = vmul.f32 %v748, %v761
      %v782 = vmul.f32 %v749, %v761
      %v783 = vmul.f32 %v750, %v761
      %v784 = vmul.f32 %v751, %v761
      %v785 = vmul.f32 %v752, %v761
      %v786 = vmul.f32 %v753, %v761
      %v787 = vmul.f32 %v754, %v761
      %v788 = vmul.f32 %v755, %v761
      %v789 = vmul.f32 %v756, %v761
      %v790 = vmul.f32 %v757, %v761
      %v791 = vmul.f32 %v758, %v761
      %v792 = vmul.f32 %v759, %v761
      %v793 = vmul.f32 %v760, %v761
      %v794 = vadd.f32 %v762, 0.0
      %v795 = vadd.f32 %v763, 0.0
      %v796 = vadd.f32 %v764, 0.0
      %v797 = vadd.f32 %v765, 0.0
      %v798 = vadd.f32 %v766, 0.0
      %v799 = vadd.f32 %v767, 0.0
      %v800 = vadd.f32 %v768, 0.0
      %v801 = vadd.f32 %v769, 0.0
      %v802 = vadd.f32 %v770, 0.0
      %v803 = vadd.f32 %v771, 0.0
      %v804 = vadd.f32 %v772, 0.0
      %v805 = vadd.f32 %v773, 0.0
      %v806 = vadd.f32 %v774, 0.0
      %v807 = vadd.f32 %v775, 0.0
      %v808 = vadd.f32 %v776, 0.0
      %v809 = vadd.f32 %v777, 0.0
      %v810 = vadd.f32 %v778, 0.0
      %v811 = vadd.f32 %v779, 0.0
      %v812 = vadd.f32 %v780, 0.0
      %v813 = vadd.f32 %v781, 0.0
      %v814 = vadd.f32 %v782, 0.0
      %v815 = vadd.f32 %v783, 0.0
      %v816 = vadd.f32 %v784, 0.0
      %v817 = vadd.f32 %v785, 0.0
      %v818 = vadd.f32 %v786, 0.0
      %v819 = vadd.f32 %v787, 0.0
      %v820 = vadd.f32 %v788, 0.0
      %v821 = vadd.f32 %v789, 0.0
      %v822 = vadd.f32 %v790, 0.0
      %v823 = vadd.f32 %v791, 0.0
      %v824 = vadd.f32 %v792, 0.0
      %v825 = vadd.f32 %v793, 0.0
      %v826 = vld [vmem:[#allocation2 + $0x8] sm:$0xff]
      %v827 = vld [vmem:[#allocation2 + $0x10] sm:$0xff]
      %v828 = vld [vmem:[#allocation2 + $0x28] sm:$0xff]
      %v829 = vld [vmem:[#allocation2 + $0x30] sm:$0xff]
      %v830 = vld [vmem:[#allocation2 + $0x48] sm:$0xff]
      %v831 = vld [vmem:[#allocation2 + $0x50] sm:$0xff]
      %v832 = vld [vmem:[#allocation2 + $0x68] sm:$0xff]
      %v833 = vld [vmem:[#allocation2 + $0x70] sm:$0xff]
      %v834 = vld [vmem:[#allocation2 + $0x88] sm:$0xff]
      %v835 = vld [vmem:[#allocation2 + $0x90] sm:$0xff]
      %v836 = vld [vmem:[#allocation2 + $0xa8] sm:$0xff]
      %v837 = vld [vmem:[#allocation2 + $0xb0] sm:$0xff]
      %v838 = vld [vmem:[#allocation2 + $0xc8] sm:$0xff]
      %v839 = vld [vmem:[#allocation2 + $0xd0] sm:$0xff]
      %v840 = vld [vmem:[#allocation2 + $0xe8] sm:$0xff]
      %v841 = vld [vmem:[#allocation2 + $0xf0] sm:$0xff]
      %v842 = vld [vmem:[#allocation2 + $0x108] sm:$0xff]
      %v843 = vld [vmem:[#allocation2 + $0x110] sm:$0xff]
      %v844 = vld [vmem:[#allocation2 + $0x128] sm:$0xff]
      %v845 = vld [vmem:[#allocation2 + $0x130] sm:$0xff]
      %v846 = vld [vmem:[#allocation2 + $0x148] sm:$0xff]
      %v847 = vld [vmem:[#allocation2 + $0x150] sm:$0xff]
      %v848 = vld [vmem:[#allocation2 + $0x168] sm:$0xff]
      %v849 = vld [vmem:[#allocation2 + $0x170] sm:$0xff]
      %v850 = vld [vmem:[#allocation2 + $0x188] sm:$0xff]
      %v851 = vld [vmem:[#allocation2 + $0x190] sm:$0xff]
      %v852 = vld [vmem:[#allocation2 + $0x1a8] sm:$0xff]
      %v853 = vld [vmem:[#allocation2 + $0x1b0] sm:$0xff]
      %v854 = vld [vmem:[#allocation2 + $0x1c8] sm:$0xff]
      %v855 = vld [vmem:[#allocation2 + $0x1d0] sm:$0xff]
      %v856 = vld [vmem:[#allocation2 + $0x1e8] sm:$0xff]
      %v857 = vld [vmem:[#allocation2 + $0x1f0] sm:$0xff]
      %v858 = vperm.slane %v726, 1
      %v859 = vmul.f32 %v826, %v858
      %v860 = vmul.f32 %v827, %v858
      %v861 = vmul.f32 %v828, %v858
      %v862 = vmul.f32 %v829, %v858
      %v863 = vmul.f32 %v830, %v858
      %v864 = vmul.f32 %v831, %v858
      %v865 = vmul.f32 %v832, %v858
      %v866 = vmul.f32 %v833, %v858
      %v867 = vmul.f32 %v834, %v858
      %v868 = vmul.f32 %v835, %v858
      %v869 = vmul.f32 %v836, %v858
      %v870 = vmul.f32 %v837, %v858
      %v871 = vmul.f32 %v838, %v858
      %v872 = vmul.f32 %v839, %v858
      %v873 = vmul.f32 %v840, %v858
      %v874 = vmul.f32 %v841, %v858
      %v875 = vmul.f32 %v842, %v858
      %v876 = vmul.f32 %v843, %v858
      %v877 = vmul.f32 %v844, %v858
      %v878 = vmul.f32 %v845, %v858
      %v879 = vmul.f32 %v846, %v858
      %v880 = vmul.f32 %v847, %v858
      %v881 = vmul.f32 %v848, %v858
      %v882 = vmul.f32 %v849, %v858
      %v883 = vmul.f32 %v850, %v858
      %v884 = vmul.f32 %v851, %v858
      %v885 = vmul.f32 %v852, %v858
      %v886 = vmul.f32 %v853, %v858
      %v887 = vmul.f32 %v854, %v858
      %v888 = vmul.f32 %v855, %v858
      %v889 = vmul.f32 %v856, %v858
      %v890 = vmul.f32 %v857, %v858
      %v891 = vadd.f32 %v794, %v859
      %v892 = vadd.f32 %v795, %v860
      %v893 = vadd.f32 %v796, %v861
      %v894 = vadd.f32 %v797, %v862
      %v895 = vadd.f32 %v798, %v863
      %v896 = vadd.f32 %v799, %v864
      %v897 = vadd.f32 %v800, %v865
      %v898 = vadd.f32 %v801, %v866
      %v899 = vadd.f32 %v802, %v867
      %v900 = vadd.f32 %v803, %v868
      %v901 = vadd.f32 %v804, %v869
      %v902 = vadd.f32 %v805, %v870
      %v903 = vadd.f32 %v806, %v871
      %v904 = vadd.f32 %v807, %v872
      %v905 = vadd.f32 %v808, %v873
      %v906 = vadd.f32 %v809, %v874
      %v907 = vadd.f32 %v810, %v875
      %v908 = vadd.f32 %v811, %v876
      %v909 = vadd.f32 %v812, %v877
      %v910 = vadd.f32 %v813, %v878
      %v911 = vadd.f32 %v814, %v879
      %v912 = vadd.f32 %v815, %v880
      %v913 = vadd.f32 %v816, %v881
      %v914 = vadd.f32 %v817, %v882
      %v915 = vadd.f32 %v818, %v883
      %v916 = vadd.f32 %v819, %v884
      %v917 = vadd.f32 %v820, %v885
      %v918 = vadd.f32 %v821, %v886
      %v919 = vadd.f32 %v822, %v887
      %v920 = vadd.f32 %v823, %v888
      %v921 = vadd.f32 %v824, %v889
      %v922 = vadd.f32 %v825, %v890
      %v923 = vld [vmem:[#allocation2 + $0x9] sm:$0xff]
      %v924 = vld [vmem:[#allocation2 + $0x11] sm:$0xff]
      %v925 = vld [vmem:[#allocation2 + $0x29] sm:$0xff]
      %v926 = vld [vmem:[#allocation2 + $0x31] sm:$0xff]
      %v927 = vld [vmem:[#allocation2 + $0x49] sm:$0xff]
      %v928 = vld [vmem:[#allocation2 + $0x51] sm:$0xff]
      %v929 = vld [vmem:[#allocation2 + $0x69] sm:$0xff]
      %v930 = vld [vmem:[#allocation2 + $0x71] sm:$0xff]
      %v931 = vld [vmem:[#allocation2 + $0x89] sm:$0xff]
      %v932 = vld [vmem:[#allocation2 + $0x91] sm:$0xff]
      %v933 = vld [vmem:[#allocation2 + $0xa9] sm:$0xff]
      %v934 = vld [vmem:[#allocation2 + $0xb1] sm:$0xff]
      %v935 = vld [vmem:[#allocation2 + $0xc9] sm:$0xff]
      %v936 = vld [vmem:[#allocation2 + $0xd1] sm:$0xff]
      %v937 = vld [vmem:[#allocation2 + $0xe9] sm:$0xff]
      %v938 = vld [vmem:[#allocation2 + $0xf1] sm:$0xff]
      %v939 = vld [vmem:[#allocation2 + $0x109] sm:$0xff]
      %v940 = vld [vmem:[#allocation2 + $0x111] sm:$0xff]
      %v941 = vld [vmem:[#allocation2 + $0x129] sm:$0xff]
      %v942 = vld [vmem:[#allocation2 + $0x131] sm:$0xff]
      %v943 = vld [vmem:[#allocation2 + $0x149] sm:$0xff]
      %v944 = vld [vmem:[#allocation2 + $0x151] sm:$0xff]
      %v945 = vld [vmem:[#allocation2 + $0x169] sm:$0xff]
      %v946 = vld [vmem:[#allocation2 + $0x171] sm:$0xff]
      %v947 = vld [vmem:[#allocation2 + $0x189] sm:$0xff]
      %v948 = vld [vmem:[#allocation2 + $0x191] sm:$0xff]
      %v949 = vld [vmem:[#allocation2 + $0x1a9] sm:$0xff]
      %v950 = vld [vmem:[#allocation2 + $0x1b1] sm:$0xff]
      %v951 = vld [vmem:[#allocation2 + $0x1c9] sm:$0xff]
      %v952 = vld [vmem:[#allocation2 + $0x1d1] sm:$0xff]
      %v953 = vld [vmem:[#allocation2 + $0x1e9] sm:$0xff]
      %v954 = vld [vmem:[#allocation2 + $0x1f1] sm:$0xff]
      %v955 = vperm.slane %v726, 2
      %v956 = vmul.f32 %v923, %v955
      %v957 = vmul.f32 %v924, %v955
      %v958 = vmul.f32 %v925, %v955
      %v959 = vmul.f32 %v926, %v955
      %v960 = vmul.f32 %v927, %v955
      %v961 = vmul.f32 %v928, %v955
      %v962 = vmul.f32 %v929, %v955
      %v963 = vmul.f32 %v930, %v955
      %v964 = vmul.f32 %v931, %v955
      %v965 = vmul.f32 %v932, %v955
      %v966 = vmul.f32 %v933, %v955
      %v967 = vmul.f32 %v934, %v955
      %v968 = vmul.f32 %v935, %v955
      %v969 = vmul.f32 %v936, %v955
      %v970 = vmul.f32 %v937, %v955
      %v971 = vmul.f32 %v938, %v955
      %v972 = vmul.f32 %v939, %v955
      %v973 = vmul.f32 %v940, %v955
      %v974 = vmul.f32 %v941, %v955
      %v975 = vmul.f32 %v942, %v955
      %v976 = vmul.f32 %v943, %v955
      %v977 = vmul.f32 %v944, %v955
      %v978 = vmul.f32 %v945, %v955
      %v979 = vmul.f32 %v946, %v955
      %v980 = vmul.f32 %v947, %v955
      %v981 = vmul.f32 %v948, %v955
      %v982 = vmul.f32 %v949, %v955
      %v983 = vmul.f32 %v950, %v955
      %v984 = vmul.f32 %v951, %v955
      %v985 = vmul.f32 %v952, %v955
      %v986 = vmul.f32 %v953, %v955
      %v987 = vmul.f32 %v954, %v955
      %v988 = vadd.f32 %v891, %v956
      %v989 = vadd.f32 %v892, %v957
      %v990 = vadd.f32 %v893, %v958
      %v991 = vadd.f32 %v894, %v959
      %v992 = vadd.f32 %v895, %v960
      %v993 = vadd.f32 %v896, %v961
      %v994 = vadd.f32 %v897, %v962
      %v995 = vadd.f32 %v898, %v963
      %v996 = vadd.f32 %v899, %v964
      %v997 = vadd.f32 %v900, %v965
      %v998 = vadd.f32 %v901, %v966
      %v999 = vadd.f32 %v902, %v967
      %v1000 = vadd.f32 %v903, %v968
      %v1001 = vadd.f32 %v904, %v969
      %v1002 = vadd.f32 %v905, %v970
      %v1003 = vadd.f32 %v906, %v971
      %v1004 = vadd.f32 %v907, %v972
      %v1005 = vadd.f32 %v908, %v973
      %v1006 = vadd.f32 %v909, %v974
      %v1007 = vadd.f32 %v910, %v975
      %v1008 = vadd.f32 %v911, %v976
      %v1009 = vadd.f32 %v912, %v977
      %v1010 = vadd.f32 %v913, %v978
      %v1011 = vadd.f32 %v914, %v979
      %v1012 = vadd.f32 %v915, %v980
      %v1013 = vadd.f32 %v916, %v981
      %v1014 = vadd.f32 %v917, %v982
      %v1015 = vadd.f32 %v918, %v983
      %v1016 = vadd.f32 %v919, %v984
      %v1017 = vadd.f32 %v920, %v985
      %v1018 = vadd.f32 %v921, %v986
      %v1019 = vadd.f32 %v922, %v987
      %v1020 = vld [vmem:[%s693 + $0x7] sm:$0xff]
      %v1021 = vld [vmem:[%s693 + $0xf] sm:$0xff]
      %v1022 = vld [vmem:[%s693 + $0x27] sm:$0xff]
      %v1023 = vld [vmem:[%s693 + $0x2f] sm:$0xff]
      %v1024 = vld [vmem:[%s693 + $0x47] sm:$0xff]
      %v1025 = vld [vmem:[%s693 + $0x4f] sm:$0xff]
      %v1026 = vld [vmem:[%s693 + $0x67] sm:$0xff]
      %v1027 = vld [vmem:[%s693 + $0x6f] sm:$0xff]
      %v1028 = vld [vmem:[%s693 + $0x87] sm:$0xff]
      %v1029 = vld [vmem:[%s693 + $0x8f] sm:$0xff]
      %v1030 = vld [vmem:[%s693 + $0xa7] sm:$0xff]
      %v1031 = vld [vmem:[%s693 + $0xaf] sm:$0xff]
      %v1032 = vld [vmem:[%s693 + $0xc7] sm:$0xff]
      %v1033 = vld [vmem:[%s693 + $0xcf] sm:$0xff]
      %v1034 = vld [vmem:[%s693 + $0xe7] sm:$0xff]
      %v1035 = vld [vmem:[%s693 + $0xef] sm:$0xff]
      %v1036 = vld [vmem:[%s693 + $0x107] sm:$0xff]
      %v1037 = vld [vmem:[%s693 + $0x10f] sm:$0xff]
      %v1038 = vld [vmem:[%s693 + $0x127] sm:$0xff]
      %v1039 = vld [vmem:[%s693 + $0x12f] sm:$0xff]
      %v1040 = vld [vmem:[%s693 + $0x147] sm:$0xff]
      %v1041 = vld [vmem:[%s693 + $0x14f] sm:$0xff]
      %v1042 = vld [vmem:[%s693 + $0x167] sm:$0xff]
      %v1043 = vld [vmem:[%s693 + $0x16f] sm:$0xff]
      %v1044 = vld [vmem:[%s693 + $0x187] sm:$0xff]
      %v1045 = vld [vmem:[%s693 + $0x18f] sm:$0xff]
      %v1046 = vld [vmem:[%s693 + $0x1a7] sm:$0xff]
      %v1047 = vld [vmem:[%s693 + $0x1af] sm:$0xff]
      %v1048 = vld [vmem:[%s693 + $0x1c7] sm:$0xff]
      %v1049 = vld [vmem:[%s693 + $0x1cf] sm:$0xff]
      %v1050 = vld [vmem:[%s693 + $0x1e7] sm:$0xff]
      %v1051 = vld [vmem:[%s693 + $0x1ef] sm:$0xff]
      %v1052 = vperm.slane %v727, 0
      %v1053 = vmul.f32 %v1020, %v1052
      %v1054 = vmul.f32 %v1021, %v1052
      %v1055 = vmul.f32 %v1022, %v1052
      %v1056 = vmul.f32 %v1023, %v1052
      %v1057 = vmul.f32 %v1024, %v1052
      %v1058 = vmul.f32 %v1025, %v1052
      %v1059 = vmul.f32 %v1026, %v1052
      %v1060 = vmul.f32 %v1027, %v1052
      %v1061 = vmul.f32 %v1028, %v1052
      %v1062 = vmul.f32 %v1029, %v1052
      %v1063 = vmul.f32 %v1030, %v1052
      %v1064 = vmul.f32 %v1031, %v1052
      %v1065 = vmul.f32 %v1032, %v1052
      %v1066 = vmul.f32 %v1033, %v1052
      %v1067 = vmul.f32 %v1034, %v1052
      %v1068 = vmul.f32 %v1035, %v1052
      %v1069 = vmul.f32 %v1036, %v1052
      %v1070 = vmul.f32 %v1037, %v1052
      %v1071 = vmul.f32 %v1038, %v1052
      %v1072 = vmul.f32 %v1039, %v1052
      %v1073 = vmul.f32 %v1040, %v1052
      %v1074 = vmul.f32 %v1041, %v1052
      %v1075 = vmul.f32 %v1042, %v1052
      %v1076 = vmul.f32 %v1043, %v1052
      %v1077 = vmul.f32 %v1044, %v1052
      %v1078 = vmul.f32 %v1045, %v1052
      %v1079 = vmul.f32 %v1046, %v1052
      %v1080 = vmul.f32 %v1047, %v1052
      %v1081 = vmul.f32 %v1048, %v1052
      %v1082 = vmul.f32 %v1049, %v1052
      %v1083 = vmul.f32 %v1050, %v1052
      %v1084 = vmul.f32 %v1051, %v1052
      %v1085 = vadd.f32 %v988, %v1053
      %v1086 = vadd.f32 %v989, %v1054
      %v1087 = vadd.f32 %v990, %v1055
      %v1088 = vadd.f32 %v991, %v1056
      %v1089 = vadd.f32 %v992, %v1057
      %v1090 = vadd.f32 %v993, %v1058
      %v1091 = vadd.f32 %v994, %v1059
      %v1092 = vadd.f32 %v995, %v1060
      %v1093 = vadd.f32 %v996, %v1061
      %v1094 = vadd.f32 %v997, %v1062
      %v1095 = vadd.f32 %v998, %v1063
      %v1096 = vadd.f32 %v999, %v1064
      %v1097 = vadd.f32 %v1000, %v1065
      %v1098 = vadd.f32 %v1001, %v1066
      %v1099 = vadd.f32 %v1002, %v1067
      %v1100 = vadd.f32 %v1003, %v1068
      %v1101 = vadd.f32 %v1004, %v1069
      %v1102 = vadd.f32 %v1005, %v1070
      %v1103 = vadd.f32 %v1006, %v1071
      %v1104 = vadd.f32 %v1007, %v1072
      %v1105 = vadd.f32 %v1008, %v1073
      %v1106 = vadd.f32 %v1009, %v1074
      %v1107 = vadd.f32 %v1010, %v1075
      %v1108 = vadd.f32 %v1011, %v1076
      %v1109 = vadd.f32 %v1012, %v1077
      %v1110 = vadd.f32 %v1013, %v1078
      %v1111 = vadd.f32 %v1014, %v1079
      %v1112 = vadd.f32 %v1015, %v1080
      %v1113 = vadd.f32 %v1016, %v1081
      %v1114 = vadd.f32 %v1017, %v1082
      %v1115 = vadd.f32 %v1018, %v1083
      %v1116 = vadd.f32 %v1019, %v1084
      %v1117 = vld [vmem:[%s693 + $0x8] sm:$0xff]
      %v1118 = vld [vmem:[%s693 + $0x10] sm:$0xff]
      %v1119 = vld [vmem:[%s693 + $0x28] sm:$0xff]
      %v1120 = vld [vmem:[%s693 + $0x30] sm:$0xff]
      %v1121 = vld [vmem:[%s693 + $0x48] sm:$0xff]
      %v1122 = vld [vmem:[%s693 + $0x50] sm:$0xff]
      %v1123 = vld [vmem:[%s693 + $0x68] sm:$0xff]
      %v1124 = vld [vmem:[%s693 + $0x70] sm:$0xff]
      %v1125 = vld [vmem:[%s693 + $0x88] sm:$0xff]
      %v1126 = vld [vmem:[%s693 + $0x90] sm:$0xff]
      %v1127 = vld [vmem:[%s693 + $0xa8] sm:$0xff]
      %v1128 = vld [vmem:[%s693 + $0xb0] sm:$0xff]
      %v1129 = vld [vmem:[%s693 + $0xc8] sm:$0xff]
      %v1130 = vld [vmem:[%s693 + $0xd0] sm:$0xff]
      %v1131 = vld [vmem:[%s693 + $0xe8] sm:$0xff]
      %v1132 = vld [vmem:[%s693 + $0xf0] sm:$0xff]
      %v1133 = vld [vmem:[%s693 + $0x108] sm:$0xff]
      %v1134 = vld [vmem:[%s693 + $0x110] sm:$0xff]
      %v1135 = vld [vmem:[%s693 + $0x128] sm:$0xff]
      %v1136 = vld [vmem:[%s693 + $0x130] sm:$0xff]
      %v1137 = vld [vmem:[%s693 + $0x148] sm:$0xff]
      %v1138 = vld [vmem:[%s693 + $0x150] sm:$0xff]
      %v1139 = vld [vmem:[%s693 + $0x168] sm:$0xff]
      %v1140 = vld [vmem:[%s693 + $0x170] sm:$0xff]
      %v1141 = vld [vmem:[%s693 + $0x188] sm:$0xff]
      %v1142 = vld [vmem:[%s693 + $0x190] sm:$0xff]
      %v1143 = vld [vmem:[%s693 + $0x1a8] sm:$0xff]
      %v1144 = vld [vmem:[%s693 + $0x1b0] sm:$0xff]
      %v1145 = vld [vmem:[%s693 + $0x1c8] sm:$0xff]
      %v1146 = vld [vmem:[%s693 + $0x1d0] sm:$0xff]
      %v1147 = vld [vmem:[%s693 + $0x1e8] sm:$0xff]
      %v1148 = vld [vmem:[%s693 + $0x1f0] sm:$0xff]
      %v1149 = vperm.slane %v727, 1
      %v1150 = vmul.f32 %v1117, %v1149
      %v1151 = vmul.f32 %v1118, %v1149
      %v1152 = vmul.f32 %v1119, %v1149
      %v1153 = vmul.f32 %v1120, %v1149
      %v1154 = vmul.f32 %v1121, %v1149
      %v1155 = vmul.f32 %v1122, %v1149
      %v1156 = vmul.f32 %v1123, %v1149
      %v1157 = vmul.f32 %v1124, %v1149
      %v1158 = vmul.f32 %v1125, %v1149
      %v1159 = vmul.f32 %v1126, %v1149
      %v1160 = vmul.f32 %v1127, %v1149
      %v1161 = vmul.f32 %v1128, %v1149
      %v1162 = vmul.f32 %v1129, %v1149
      %v1163 = vmul.f32 %v1130, %v1149
      %v1164 = vmul.f32 %v1131, %v1149
      %v1165 = vmul.f32 %v1132, %v1149
      %v1166 = vmul.f32 %v1133, %v1149
      %v1167 = vmul.f32 %v1134, %v1149
      %v1168 = vmul.f32 %v1135, %v1149
      %v1169 = vmul.f32 %v1136, %v1149
      %v1170 = vmul.f32 %v1137, %v1149
      %v1171 = vmul.f32 %v1138, %v1149
      %v1172 = vmul.f32 %v1139, %v1149
      %v1173 = vmul.f32 %v1140, %v1149
      %v1174 = vmul.f32 %v1141, %v1149
      %v1175 = vmul.f32 %v1142, %v1149
      %v1176 = vmul.f32 %v1143, %v1149
      %v1177 = vmul.f32 %v1144, %v1149
      %v1178 = vmul.f32 %v1145, %v1149
      %v1179 = vmul.f32 %v1146, %v1149
      %v1180 = vmul.f32 %v1147, %v1149
      %v1181 = vmul.f32 %v1148, %v1149
      %v1182 = vadd.f32 %v1085, %v1150
      %v1183 = vadd.f32 %v1086, %v1151
      %v1184 = vadd.f32 %v1087, %v1152
      %v1185 = vadd.f32 %v1088, %v1153
      %v1186 = vadd.f32 %v1089, %v1154
      %v1187 = vadd.f32 %v1090, %v1155
      %v1188 = vadd.f32 %v1091, %v1156
      %v1189 = vadd.f32 %v1092, %v1157
      %v1190 = vadd.f32 %v1093, %v1158
      %v1191 = vadd.f32 %v1094, %v1159
      %v1192 = vadd.f32 %v1095, %v1160
      %v1193 = vadd.f32 %v1096, %v1161
      %v1194 = vadd.f32 %v1097, %v1162
      %v1195 = vadd.f32 %v1098, %v1163
      %v1196 = vadd.f32 %v1099, %v1164
      %v1197 = vadd.f32 %v1100, %v1165
      %v1198 = vadd.f32 %v1101, %v1166
      %v1199 = vadd.f32 %v1102, %v1167
      %v1200 = vadd.f32 %v1103, %v1168
      %v1201 = vadd.f32 %v1104, %v1169
      %v1202 = vadd.f32 %v1105, %v1170
      %v1203 = vadd.f32 %v1106, %v1171
      %v1204 = vadd.f32 %v1107, %v1172
      %v1205 = vadd.f32 %v1108, %v1173
      %v1206 = vadd.f32 %v1109, %v1174
      %v1207 = vadd.f32 %v1110, %v1175
      %v1208 = vadd.f32 %v1111, %v1176
      %v1209 = vadd.f32 %v1112, %v1177
      %v1210 = vadd.f32 %v1113, %v1178
      %v1211 = vadd.f32 %v1114, %v1179
      %v1212 = vadd.f32 %v1115, %v1180
      %v1213 = vadd.f32 %v1116, %v1181
      %v1214 = vld [vmem:[%s693 + $0x9] sm:$0xff]
      %v1215 = vld [vmem:[%s693 + $0x11] sm:$0xff]
      %v1216 = vld [vmem:[%s693 + $0x29] sm:$0xff]
      %v1217 = vld [vmem:[%s693 + $0x31] sm:$0xff]
      %v1218 = vld [vmem:[%s693 + $0x49] sm:$0xff]
      %v1219 = vld [vmem:[%s693 + $0x51] sm:$0xff]
      %v1220 = vld [vmem:[%s693 + $0x69] sm:$0xff]
      %v1221 = vld [vmem:[%s693 + $0x71] sm:$0xff]
      %v1222 = vld [vmem:[%s693 + $0x89] sm:$0xff]
      %v1223 = vld [vmem:[%s693 + $0x91] sm:$0xff]
      %v1224 = vld [vmem:[%s693 + $0xa9] sm:$0xff]
      %v1225 = vld [vmem:[%s693 + $0xb1] sm:$0xff]
      %v1226 = vld [vmem:[%s693 + $0xc9] sm:$0xff]
      %v1227 = vld [vmem:[%s693 + $0xd1] sm:$0xff]
      %v1228 = vld [vmem:[%s693 + $0xe9] sm:$0xff]
      %v1229 = vld [vmem:[%s693 + $0xf1] sm:$0xff]
      %v1230 = vld [vmem:[%s693 + $0x109] sm:$0xff]
      %v1231 = vld [vmem:[%s693 + $0x111] sm:$0xff]
      %v1232 = vld [vmem:[%s693 + $0x129] sm:$0xff]
      %v1233 = vld [vmem:[%s693 + $0x131] sm:$0xff]
      %v1234 = vld [vmem:[%s693 + $0x149] sm:$0xff]
      %v1235 = vld [vmem:[%s693 + $0x151] sm:$0xff]
      %v1236 = vld [vmem:[%s693 + $0x169] sm:$0xff]
      %v1237 = vld [vmem:[%s693 + $0x171] sm:$0xff]
      %v1238 = vld [vmem:[%s693 + $0x189] sm:$0xff]
      %v1239 = vld [vmem:[%s693 + $0x191] sm:$0xff]
      %v1240 = vld [vmem:[%s693 + $0x1a9] sm:$0xff]
      %v1241 = vld [vmem:[%s693 + $0x1b1] sm:$0xff]
      %v1242 = vld [vmem:[%s693 + $0x1c9] sm:$0xff]
      %v1243 = vld [vmem:[%s693 + $0x1d1] sm:$0xff]
      %v1244 = vld [vmem:[%s693 + $0x1e9] sm:$0xff]
      %v1245 = vld [vmem:[%s693 + $0x1f1] sm:$0xff]
      %v1246 = vperm.slane %v727, 2
      %v1247 = vmul.f32 %v1214, %v1246
      %v1248 = vmul.f32 %v1215, %v1246
      %v1249 = vmul.f32 %v1216, %v1246
      %v1250 = vmul.f32 %v1217, %v1246
      %v1251 = vmul.f32 %v1218, %v1246
      %v1252 = vmul.f32 %v1219, %v1246
      %v1253 = vmul.f32 %v1220, %v1246
      %v1254 = vmul.f32 %v1221, %v1246
      %v1255 = vmul.f32 %v1222, %v1246
      %v1256 = vmul.f32 %v1223, %v1246
      %v1257 = vmul.f32 %v1224, %v1246
      %v1258 = vmul.f32 %v1225, %v1246
      %v1259 = vmul.f32 %v1226, %v1246
      %v1260 = vmul.f32 %v1227, %v1246
      %v1261 = vmul.f32 %v1228, %v1246
      %v1262 = vmul.f32 %v1229, %v1246
      %v1263 = vmul.f32 %v1230, %v1246
      %v1264 = vmul.f32 %v1231, %v1246
      %v1265 = vmul.f32 %v1232, %v1246
      %v1266 = vmul.f32 %v1233, %v1246
      %v1267 = vmul.f32 %v1234, %v1246
      %v1268 = vmul.f32 %v1235, %v1246
      %v1269 = vmul.f32 %v1236, %v1246
      %v1270 = vmul.f32 %v1237, %v1246
      %v1271 = vmul.f32 %v1238, %v1246
      %v1272 = vmul.f32 %v1239, %v1246
      %v1273 = vmul.f32 %v1240, %v1246
      %v1274 = vmul.f32 %v1241, %v1246
      %v1275 = vmul.f32 %v1242, %v1246
      %v1276 = vmul.f32 %v1243, %v1246
      %v1277 = vmul.f32 %v1244, %v1246
      %v1278 = vmul.f32 %v1245, %v1246
      %v1279 = vadd.f32 %v1182, %v1247
      %v1280 = vadd.f32 %v1183, %v1248
      %v1281 = vadd.f32 %v1184, %v1249
      %v1282 = vadd.f32 %v1185, %v1250
      %v1283 = vadd.f32 %v1186, %v1251
      %v1284 = vadd.f32 %v1187, %v1252
      %v1285 = vadd.f32 %v1188, %v1253
      %v1286 = vadd.f32 %v1189, %v1254
      %v1287 = vadd.f32 %v1190, %v1255
      %v1288 = vadd.f32 %v1191, %v1256
      %v1289 = vadd.f32 %v1192, %v1257
      %v1290 = vadd.f32 %v1193, %v1258
      %v1291 = vadd.f32 %v1194, %v1259
      %v1292 = vadd.f32 %v1195, %v1260
      %v1293 = vadd.f32 %v1196, %v1261
      %v1294 = vadd.f32 %v1197, %v1262
      %v1295 = vadd.f32 %v1198, %v1263
      %v1296 = vadd.f32 %v1199, %v1264
      %v1297 = vadd.f32 %v1200, %v1265
      %v1298 = vadd.f32 %v1201, %v1266
      %v1299 = vadd.f32 %v1202, %v1267
      %v1300 = vadd.f32 %v1203, %v1268
      %v1301 = vadd.f32 %v1204, %v1269
      %v1302 = vadd.f32 %v1205, %v1270
      %v1303 = vadd.f32 %v1206, %v1271
      %v1304 = vadd.f32 %v1207, %v1272
      %v1305 = vadd.f32 %v1208, %v1273
      %v1306 = vadd.f32 %v1209, %v1274
      %v1307 = vadd.f32 %v1210, %v1275
      %v1308 = vadd.f32 %v1211, %v1276
      %v1309 = vadd.f32 %v1212, %v1277
      %v1310 = vadd.f32 %v1213, %v1278
      %s1311 = scalar_lea.vmem [#allocation2], 64
      %v1312 = vld [vmem:[%s1311 + $0x7] sm:$0xff]
      %v1313 = vld [vmem:[%s1311 + $0xf] sm:$0xff]
      %v1314 = vld [vmem:[%s1311 + $0x27] sm:$0xff]
      %v1315 = vld [vmem:[%s1311 + $0x2f] sm:$0xff]
      %v1316 = vld [vmem:[%s1311 + $0x47] sm:$0xff]
      %v1317 = vld [vmem:[%s1311 + $0x4f] sm:$0xff]
      %v1318 = vld [vmem:[%s1311 + $0x67] sm:$0xff]
      %v1319 = vld [vmem:[%s1311 + $0x6f] sm:$0xff]
      %v1320 = vld [vmem:[%s1311 + $0x87] sm:$0xff]
      %v1321 = vld [vmem:[%s1311 + $0x8f] sm:$0xff]
      %v1322 = vld [vmem:[%s1311 + $0xa7] sm:$0xff]
      %v1323 = vld [vmem:[%s1311 + $0xaf] sm:$0xff]
      %v1324 = vld [vmem:[%s1311 + $0xc7] sm:$0xff]
      %v1325 = vld [vmem:[%s1311 + $0xcf] sm:$0xff]
      %v1326 = vld [vmem:[%s1311 + $0xe7] sm:$0xff]
      %v1327 = vld [vmem:[%s1311 + $0xef] sm:$0xff]
      %v1328 = vld [vmem:[%s1311 + $0x107] sm:$0xff]
      %v1329 = vld [vmem:[%s1311 + $0x10f] sm:$0xff]
      %v1330 = vld [vmem:[%s1311 + $0x127] sm:$0xff]
      %v1331 = vld [vmem:[%s1311 + $0x12f] sm:$0xff]
      %v1332 = vld [vmem:[%s1311 + $0x147] sm:$0xff]
      %v1333 = vld [vmem:[%s1311 + $0x14f] sm:$0xff]
      %v1334 = vld [vmem:[%s1311 + $0x167] sm:$0xff]
      %v1335 = vld [vmem:[%s1311 + $0x16f] sm:$0xff]
      %v1336 = vld [vmem:[%s1311 + $0x187] sm:$0xff]
      %v1337 = vld [vmem:[%s1311 + $0x18f] sm:$0xff]
      %v1338 = vld [vmem:[%s1311 + $0x1a7] sm:$0xff]
      %v1339 = vld [vmem:[%s1311 + $0x1af] sm:$0xff]
      %v1340 = vld [vmem:[%s1311 + $0x1c7] sm:$0xff]
      %v1341 = vld [vmem:[%s1311 + $0x1cf] sm:$0xff]
      %v1342 = vld [vmem:[%s1311 + $0x1e7] sm:$0xff]
      %v1343 = vld [vmem:[%s1311 + $0x1ef] sm:$0xff]
      %v1344 = vperm.slane %v728, 0
      %v1345 = vmul.f32 %v1312, %v1344
      %v1346 = vmul.f32 %v1313, %v1344
      %v1347 = vmul.f32 %v1314, %v1344
      %v1348 = vmul.f32 %v1315, %v1344
      %v1349 = vmul.f32 %v1316, %v1344
      %v1350 = vmul.f32 %v1317, %v1344
      %v1351 = vmul.f32 %v1318, %v1344
      %v1352 = vmul.f32 %v1319, %v1344
      %v1353 = vmul.f32 %v1320, %v1344
      %v1354 = vmul.f32 %v1321, %v1344
      %v1355 = vmul.f32 %v1322, %v1344
      %v1356 = vmul.f32 %v1323, %v1344
      %v1357 = vmul.f32 %v1324, %v1344
      %v1358 = vmul.f32 %v1325, %v1344
      %v1359 = vmul.f32 %v1326, %v1344
      %v1360 = vmul.f32 %v1327, %v1344
      %v1361 = vmul.f32 %v1328, %v1344
      %v1362 = vmul.f32 %v1329, %v1344
      %v1363 = vmul.f32 %v1330, %v1344
      %v1364 = vmul.f32 %v1331, %v1344
      %v1365 = vmul.f32 %v1332, %v1344
      %v1366 = vmul.f32 %v1333, %v1344
      %v1367 = vmul.f32 %v1334, %v1344
      %v1368 = vmul.f32 %v1335, %v1344
      %v1369 = vmul.f32 %v1336, %v1344
      %v1370 = vmul.f32 %v1337, %v1344
      %v1371 = vmul.f32 %v1338, %v1344
      %v1372 = vmul.f32 %v1339, %v1344
      %v1373 = vmul.f32 %v1340, %v1344
      %v1374 = vmul.f32 %v1341, %v1344
      %v1375 = vmul.f32 %v1342, %v1344
      %v1376 = vmul.f32 %v1343, %v1344
      %v1377 = vadd.f32 %v1279, %v1345
      %v1378 = vadd.f32 %v1280, %v1346
      %v1379 = vadd.f32 %v1281, %v1347
      %v1380 = vadd.f32 %v1282, %v1348
      %v1381 = vadd.f32 %v1283, %v1349
      %v1382 = vadd.f32 %v1284, %v1350
      %v1383 = vadd.f32 %v1285, %v1351
      %v1384 = vadd.f32 %v1286, %v1352
      %v1385 = vadd.f32 %v1287, %v1353
      %v1386 = vadd.f32 %v1288, %v1354
      %v1387 = vadd.f32 %v1289, %v1355
      %v1388 = vadd.f32 %v1290, %v1356
      %v1389 = vadd.f32 %v1291, %v1357
      %v1390 = vadd.f32 %v1292, %v1358
      %v1391 = vadd.f32 %v1293, %v1359
      %v1392 = vadd.f32 %v1294, %v1360
      %v1393 = vadd.f32 %v1295, %v1361
      %v1394 = vadd.f32 %v1296, %v1362
      %v1395 = vadd.f32 %v1297, %v1363
      %v1396 = vadd.f32 %v1298, %v1364
      %v1397 = vadd.f32 %v1299, %v1365
      %v1398 = vadd.f32 %v1300, %v1366
      %v1399 = vadd.f32 %v1301, %v1367
      %v1400 = vadd.f32 %v1302, %v1368
      %v1401 = vadd.f32 %v1303, %v1369
      %v1402 = vadd.f32 %v1304, %v1370
      %v1403 = vadd.f32 %v1305, %v1371
      %v1404 = vadd.f32 %v1306, %v1372
      %v1405 = vadd.f32 %v1307, %v1373
      %v1406 = vadd.f32 %v1308, %v1374
      %v1407 = vadd.f32 %v1309, %v1375
      %v1408 = vadd.f32 %v1310, %v1376
      %v1409 = vld [vmem:[%s1311 + $0x8] sm:$0xff]
      %v1410 = vld [vmem:[%s1311 + $0x10] sm:$0xff]
      %v1411 = vld [vmem:[%s1311 + $0x28] sm:$0xff]
      %v1412 = vld [vmem:[%s1311 + $0x30] sm:$0xff]
      %v1413 = vld [vmem:[%s1311 + $0x48] sm:$0xff]
      %v1414 = vld [vmem:[%s1311 + $0x50] sm:$0xff]
      %v1415 = vld [vmem:[%s1311 + $0x68] sm:$0xff]
      %v1416 = vld [vmem:[%s1311 + $0x70] sm:$0xff]
      %v1417 = vld [vmem:[%s1311 + $0x88] sm:$0xff]
      %v1418 = vld [vmem:[%s1311 + $0x90] sm:$0xff]
      %v1419 = vld [vmem:[%s1311 + $0xa8] sm:$0xff]
      %v1420 = vld [vmem:[%s1311 + $0xb0] sm:$0xff]
      %v1421 = vld [vmem:[%s1311 + $0xc8] sm:$0xff]
      %v1422 = vld [vmem:[%s1311 + $0xd0] sm:$0xff]
      %v1423 = vld [vmem:[%s1311 + $0xe8] sm:$0xff]
      %v1424 = vld [vmem:[%s1311 + $0xf0] sm:$0xff]
      %v1425 = vld [vmem:[%s1311 + $0x108] sm:$0xff]
      %v1426 = vld [vmem:[%s1311 + $0x110] sm:$0xff]
      %v1427 = vld [vmem:[%s1311 + $0x128] sm:$0xff]
      %v1428 = vld [vmem:[%s1311 + $0x130] sm:$0xff]
      %v1429 = vld [vmem:[%s1311 + $0x148] sm:$0xff]
      %v1430 = vld [vmem:[%s1311 + $0x150] sm:$0xff]
      %v1431 = vld [vmem:[%s1311 + $0x168] sm:$0xff]
      %v1432 = vld [vmem:[%s1311 + $0x170] sm:$0xff]
      %v1433 = vld [vmem:[%s1311 + $0x188] sm:$0xff]
      %v1434 = vld [vmem:[%s1311 + $0x190] sm:$0xff]
      %v1435 = vld [vmem:[%s1311 + $0x1a8] sm:$0xff]
      %v1436 = vld [vmem:[%s1311 + $0x1b0] sm:$0xff]
      %v1437 = vld [vmem:[%s1311 + $0x1c8] sm:$0xff]
      %v1438 = vld [vmem:[%s1311 + $0x1d0] sm:$0xff]
      %v1439 = vld [vmem:[%s1311 + $0x1e8] sm:$0xff]
      %v1440 = vld [vmem:[%s1311 + $0x1f0] sm:$0xff]
      %v1441 = vperm.slane %v728, 1
      %v1442 = vmul.f32 %v1409, %v1441
      %v1443 = vmul.f32 %v1410, %v1441
      %v1444 = vmul.f32 %v1411, %v1441
      %v1445 = vmul.f32 %v1412, %v1441
      %v1446 = vmul.f32 %v1413, %v1441
      %v1447 = vmul.f32 %v1414, %v1441
      %v1448 = vmul.f32 %v1415, %v1441
      %v1449 = vmul.f32 %v1416, %v1441
      %v1450 = vmul.f32 %v1417, %v1441
      %v1451 = vmul.f32 %v1418, %v1441
      %v1452 = vmul.f32 %v1419, %v1441
      %v1453 = vmul.f32 %v1420, %v1441
      %v1454 = vmul.f32 %v1421, %v1441
      %v1455 = vmul.f32 %v1422, %v1441
      %v1456 = vmul.f32 %v1423, %v1441
      %v1457 = vmul.f32 %v1424, %v1441
      %v1458 = vmul.f32 %v1425, %v1441
      %v1459 = vmul.f32 %v1426, %v1441
      %v1460 = vmul.f32 %v1427, %v1441
      %v1461 = vmul.f32 %v1428, %v1441
      %v1462 = vmul.f32 %v1429, %v1441
      %v1463 = vmul.f32 %v1430, %v1441
      %v1464 = vmul.f32 %v1431, %v1441
      %v1465 = vmul.f32 %v1432, %v1441
      %v1466 = vmul.f32 %v1433, %v1441
      %v1467 = vmul.f32 %v1434, %v1441
      %v1468 = vmul.f32 %v1435, %v1441
      %v1469 = vmul.f32 %v1436, %v1441
      %v1470 = vmul.f32 %v1437, %v1441
      %v1471 = vmul.f32 %v1438, %v1441
      %v1472 = vmul.f32 %v1439, %v1441
      %v1473 = vmul.f32 %v1440, %v1441
      %v1474 = vadd.f32 %v1377, %v1442
      %v1475 = vadd.f32 %v1378, %v1443
      %v1476 = vadd.f32 %v1379, %v1444
      %v1477 = vadd.f32 %v1380, %v1445
      %v1478 = vadd.f32 %v1381, %v1446
      %v1479 = vadd.f32 %v1382, %v1447
      %v1480 = vadd.f32 %v1383, %v1448
      %v1481 = vadd.f32 %v1384, %v1449
      %v1482 = vadd.f32 %v1385, %v1450
      %v1483 = vadd.f32 %v1386, %v1451
      %v1484 = vadd.f32 %v1387, %v1452
      %v1485 = vadd.f32 %v1388, %v1453
      %v1486 = vadd.f32 %v1389, %v1454
      %v1487 = vadd.f32 %v1390, %v1455
      %v1488 = vadd.f32 %v1391, %v1456
      %v1489 = vadd.f32 %v1392, %v1457
      %v1490 = vadd.f32 %v1393, %v1458
      %v1491 = vadd.f32 %v1394, %v1459
      %v1492 = vadd.f32 %v1395, %v1460
      %v1493 = vadd.f32 %v1396, %v1461
      %v1494 = vadd.f32 %v1397, %v1462
      %v1495 = vadd.f32 %v1398, %v1463
      %v1496 = vadd.f32 %v1399, %v1464
      %v1497 = vadd.f32 %v1400, %v1465
      %v1498 = vadd.f32 %v1401, %v1466
      %v1499 = vadd.f32 %v1402, %v1467
      %v1500 = vadd.f32 %v1403, %v1468
      %v1501 = vadd.f32 %v1404, %v1469
      %v1502 = vadd.f32 %v1405, %v1470
      %v1503 = vadd.f32 %v1406, %v1471
      %v1504 = vadd.f32 %v1407, %v1472
      %v1505 = vadd.f32 %v1408, %v1473
      %v1506 = vld [vmem:[%s1311 + $0x9] sm:$0xff]
      %v1507 = vld [vmem:[%s1311 + $0x11] sm:$0xff]
      %v1508 = vld [vmem:[%s1311 + $0x29] sm:$0xff]
      %v1509 = vld [vmem:[%s1311 + $0x31] sm:$0xff]
      %v1510 = vld [vmem:[%s1311 + $0x49] sm:$0xff]
      %v1511 = vld [vmem:[%s1311 + $0x51] sm:$0xff]
      %v1512 = vld [vmem:[%s1311 + $0x69] sm:$0xff]
      %v1513 = vld [vmem:[%s1311 + $0x71] sm:$0xff]
      %v1514 = vld [vmem:[%s1311 + $0x89] sm:$0xff]
      %v1515 = vld [vmem:[%s1311 + $0x91] sm:$0xff]
      %v1516 = vld [vmem:[%s1311 + $0xa9] sm:$0xff]
      %v1517 = vld [vmem:[%s1311 + $0xb1] sm:$0xff]
      %v1518 = vld [vmem:[%s1311 + $0xc9] sm:$0xff]
      %v1519 = vld [vmem:[%s1311 + $0xd1] sm:$0xff]
      %v1520 = vld [vmem:[%s1311 + $0xe9] sm:$0xff]
      %v1521 = vld [vmem:[%s1311 + $0xf1] sm:$0xff]
      %v1522 = vld [vmem:[%s1311 + $0x109] sm:$0xff]
      %v1523 = vld [vmem:[%s1311 + $0x111] sm:$0xff]
      %v1524 = vld [vmem:[%s1311 + $0x129] sm:$0xff]
      %v1525 = vld [vmem:[%s1311 + $0x131] sm:$0xff]
      %v1526 = vld [vmem:[%s1311 + $0x149] sm:$0xff]
      %v1527 = vld [vmem:[%s1311 + $0x151] sm:$0xff]
      %v1528 = vld [vmem:[%s1311 + $0x169] sm:$0xff]
      %v1529 = vld [vmem:[%s1311 + $0x171] sm:$0xff]
      %v1530 = vld [vmem:[%s1311 + $0x189] sm:$0xff]
      %v1531 = vld [vmem:[%s1311 + $0x191] sm:$0xff]
      %v1532 = vld [vmem:[%s1311 + $0x1a9] sm:$0xff]
      %v1533 = vld [vmem:[%s1311 + $0x1b1] sm:$0xff]
      %v1534 = vld [vmem:[%s1311 + $0x1c9] sm:$0xff]
      %v1535 = vld [vmem:[%s1311 + $0x1d1] sm:$0xff]
      %v1536 = vld [vmem:[%s1311 + $0x1e9] sm:$0xff]
      %v1537 = vld [vmem:[%s1311 + $0x1f1] sm:$0xff]
      %v1538 = vperm.slane %v728, 2
      %v1539 = vmul.f32 %v1506, %v1538
      %v1540 = vmul.f32 %v1507, %v1538
      %v1541 = vmul.f32 %v1508, %v1538
      %v1542 = vmul.f32 %v1509, %v1538
      %v1543 = vmul.f32 %v1510, %v1538
      %v1544 = vmul.f32 %v1511, %v1538
      %v1545 = vmul.f32 %v1512, %v1538
      %v1546 = vmul.f32 %v1513, %v1538
      %v1547 = vmul.f32 %v1514, %v1538
      %v1548 = vmul.f32 %v1515, %v1538
      %v1549 = vmul.f32 %v1516, %v1538
      %v1550 = vmul.f32 %v1517, %v1538
      %v1551 = vmul.f32 %v1518, %v1538
      %v1552 = vmul.f32 %v1519, %v1538
      %v1553 = vmul.f32 %v1520, %v1538
      %v1554 = vmul.f32 %v1521, %v1538
      %v1555 = vmul.f32 %v1522, %v1538
      %v1556 = vmul.f32 %v1523, %v1538
      %v1557 = vmul.f32 %v1524, %v1538
      %v1558 = vmul.f32 %v1525, %v1538
      %v1559 = vmul.f32 %v1526, %v1538
      %v1560 = vmul.f32 %v1527, %v1538
      %v1561 = vmul.f32 %v1528, %v1538
      %v1562 = vmul.f32 %v1529, %v1538
      %v1563 = vmul.f32 %v1530, %v1538
      %v1564 = vmul.f32 %v1531, %v1538
      %v1565 = vmul.f32 %v1532, %v1538
      %v1566 = vmul.f32 %v1533, %v1538
      %v1567 = vmul.f32 %v1534, %v1538
      %v1568 = vmul.f32 %v1535, %v1538
      %v1569 = vmul.f32 %v1536, %v1538
      %v1570 = vmul.f32 %v1537, %v1538
      %v1571 = vadd.f32 %v1474, %v1539
      %v1572 = vadd.f32 %v1475, %v1540
      %v1573 = vadd.f32 %v1476, %v1541
      %v1574 = vadd.f32 %v1477, %v1542
      %v1575 = vadd.f32 %v1478, %v1543
      %v1576 = vadd.f32 %v1479, %v1544
      %v1577 = vadd.f32 %v1480, %v1545
      %v1578 = vadd.f32 %v1481, %v1546
      %v1579 = vadd.f32 %v1482, %v1547
      %v1580 = vadd.f32 %v1483, %v1548
      %v1581 = vadd.f32 %v1484, %v1549
      %v1582 = vadd.f32 %v1485, %v1550
      %v1583 = vadd.f32 %v1486, %v1551
      %v1584 = vadd.f32 %v1487, %v1552
      %v1585 = vadd.f32 %v1488, %v1553
      %v1586 = vadd.f32 %v1489, %v1554
      %v1587 = vadd.f32 %v1490, %v1555
      %v1588 = vadd.f32 %v1491, %v1556
      %v1589 = vadd.f32 %v1492, %v1557
      %v1590 = vadd.f32 %v1493, %v1558
      %v1591 = vadd.f32 %v1494, %v1559
      %v1592 = vadd.f32 %v1495, %v1560
      %v1593 = vadd.f32 %v1496, %v1561
      %v1594 = vadd.f32 %v1497, %v1562
      %v1595 = vadd.f32 %v1498, %v1563
      %v1596 = vadd.f32 %v1499, %v1564
      %v1597 = vadd.f32 %v1500, %v1565
      %v1598 = vadd.f32 %v1501, %v1566
      %v1599 = vadd.f32 %v1502, %v1567
      %v1600 = vadd.f32 %v1503, %v1568
      %v1601 = vadd.f32 %v1504, %v1569
      %v1602 = vadd.f32 %v1505, %v1570
      %v1603 = vld [vmem:[%s4] sm:$0x1]
      %v1605 = vperm.slane %v1603, 0
      %v1607 = vadd.f32 %v1571, %v1605
      %v1608 = vadd.f32 %v1572, %v1605
      %v1609 = vadd.f32 %v1573, %v1605
      %v1610 = vadd.f32 %v1574, %v1605
      %v1611 = vadd.f32 %v1575, %v1605
      %v1612 = vadd.f32 %v1576, %v1605
      %v1613 = vadd.f32 %v1577, %v1605
      %v1614 = vadd.f32 %v1578, %v1605
      %v1615 = vadd.f32 %v1579, %v1605
      %v1616 = vadd.f32 %v1580, %v1605
      %v1617 = vadd.f32 %v1581, %v1605
      %v1618 = vadd.f32 %v1582, %v1605
      %v1619 = vadd.f32 %v1583, %v1605
      %v1620 = vadd.f32 %v1584, %v1605
      %v1621 = vadd.f32 %v1585, %v1605
      %v1622 = vadd.f32 %v1586, %v1605
      %v1623 = vadd.f32 %v1587, %v1605
      %v1624 = vadd.f32 %v1588, %v1605
      %v1625 = vadd.f32 %v1589, %v1605
      %v1626 = vadd.f32 %v1590, %v1605
      %v1627 = vadd.f32 %v1591, %v1605
      %v1628 = vadd.f32 %v1592, %v1605
      %v1629 = vadd.f32 %v1593, %v1605
      %v1630 = vadd.f32 %v1594, %v1605
      %v1631 = vadd.f32 %v1595, %v1605
      %v1632 = vadd.f32 %v1596, %v1605
      %v1633 = vadd.f32 %v1597, %v1605
      %v1634 = vadd.f32 %v1598, %v1605
      %v1635 = vadd.f32 %v1599, %v1605
      %v1636 = vadd.f32 %v1600, %v1605
      %v1637 = vadd.f32 %v1601, %v1605
      %v1638 = vadd.f32 %v1602, %v1605
      %vm1639 = vcmp.gt.f32.partialorder %v1607, 0.0
      %vm1640 = vcmp.gt.f32.partialorder %v1608, 0.0
      %vm1641 = vcmp.gt.f32.partialorder %v1609, 0.0
      %vm1642 = vcmp.gt.f32.partialorder %v1610, 0.0
      %vm1643 = vcmp.gt.f32.partialorder %v1611, 0.0
      %vm1644 = vcmp.gt.f32.partialorder %v1612, 0.0
      %vm1645 = vcmp.gt.f32.partialorder %v1613, 0.0
      %vm1646 = vcmp.gt.f32.partialorder %v1614, 0.0
      %vm1647 = vcmp.gt.f32.partialorder %v1615, 0.0
      %vm1648 = vcmp.gt.f32.partialorder %v1616, 0.0
      %vm1649 = vcmp.gt.f32.partialorder %v1617, 0.0
      %vm1650 = vcmp.gt.f32.partialorder %v1618, 0.0
      %vm1651 = vcmp.gt.f32.partialorder %v1619, 0.0
      %vm1652 = vcmp.gt.f32.partialorder %v1620, 0.0
      %vm1653 = vcmp.gt.f32.partialorder %v1621, 0.0
      %vm1654 = vcmp.gt.f32.partialorder %v1622, 0.0
      %vm1655 = vcmp.gt.f32.partialorder %v1623, 0.0
      %vm1656 = vcmp.gt.f32.partialorder %v1624, 0.0
      %vm1657 = vcmp.gt.f32.partialorder %v1625, 0.0
      %vm1658 = vcmp.gt.f32.partialorder %v1626, 0.0
      %vm1659 = vcmp.gt.f32.partialorder %v1627, 0.0
      %vm1660 = vcmp.gt.f32.partialorder %v1628, 0.0
      %vm1661 = vcmp.gt.f32.partialorder %v1629, 0.0
      %vm1662 = vcmp.gt.f32.partialorder %v1630, 0.0
      %vm1663 = vcmp.gt.f32.partialorder %v1631, 0.0
      %vm1664 = vcmp.gt.f32.partialorder %v1632, 0.0
      %vm1665 = vcmp.gt.f32.partialorder %v1633, 0.0
      %vm1666 = vcmp.gt.f32.partialorder %v1634, 0.0
      %vm1667 = vcmp.gt.f32.partialorder %v1635, 0.0
      %vm1668 = vcmp.gt.f32.partialorder %v1636, 0.0
      %vm1669 = vcmp.gt.f32.partialorder %v1637, 0.0
      %vm1670 = vcmp.gt.f32.partialorder %v1638, 0.0
      %v1671 = vmul.f32 %v1607, 0.01
      %v1672 = vmul.f32 %v1608, 0.01
      %v1673 = vmul.f32 %v1609, 0.01
      %v1674 = vmul.f32 %v1610, 0.01
      %v1675 = vmul.f32 %v1611, 0.01
      %v1676 = vmul.f32 %v1612, 0.01
      %v1677 = vmul.f32 %v1613, 0.01
      %v1678 = vmul.f32 %v1614, 0.01
      %v1679 = vmul.f32 %v1615, 0.01
      %v1680 = vmul.f32 %v1616, 0.01
      %v1681 = vmul.f32 %v1617, 0.01
      %v1682 = vmul.f32 %v1618, 0.01
      %v1683 = vmul.f32 %v1619, 0.01
      %v1684 = vmul.f32 %v1620, 0.01
      %v1685 = vmul.f32 %v1621, 0.01
      %v1686 = vmul.f32 %v1622, 0.01
      %v1687 = vmul.f32 %v1623, 0.01
      %v1688 = vmul.f32 %v1624, 0.01
      %v1689 = vmul.f32 %v1625, 0.01
      %v1690 = vmul.f32 %v1626, 0.01
      %v1691 = vmul.f32 %v1627, 0.01
      %v1692 = vmul.f32 %v1628, 0.01
      %v1693 = vmul.f32 %v1629, 0.01
      %v1694 = vmul.f32 %v1630, 0.01
      %v1695 = vmul.f32 %v1631, 0.01
      %v1696 = vmul.f32 %v1632, 0.01
      %v1697 = vmul.f32 %v1633, 0.01
      %v1698 = vmul.f32 %v1634, 0.01
      %v1699 = vmul.f32 %v1635, 0.01
      %v1700 = vmul.f32 %v1636, 0.01
      %v1701 = vmul.f32 %v1637, 0.01
      %v1702 = vmul.f32 %v1638, 0.01
      %v1703 = vsel %vm1639, %v1607, %v1671
      %v1704 = vsel %vm1640, %v1608, %v1672
      %v1705 = vsel %vm1641, %v1609, %v1673
      %v1706 = vsel %vm1642, %v1610, %v1674
      %v1707 = vsel %vm1643, %v1611, %v1675
      %v1708 = vsel %vm1644, %v1612, %v1676
      %v1709 = vsel %vm1645, %v1613, %v1677
      %v1710 = vsel %vm1646, %v1614, %v1678
      %v1711 = vsel %vm1647, %v1615, %v1679
      %v1712 = vsel %vm1648, %v1616, %v1680
      %v1713 = vsel %vm1649, %v1617, %v1681
      %v1714 = vsel %vm1650, %v1618, %v1682
      %v1715 = vsel %vm1651, %v1619, %v1683
      %v1716 = vsel %vm1652, %v1620, %v1684
      %v1717 = vsel %vm1653, %v1621, %v1685
      %v1718 = vsel %vm1654, %v1622, %v1686
      %v1719 = vsel %vm1655, %v1623, %v1687
      %v1720 = vsel %vm1656, %v1624, %v1688
      %v1721 = vsel %vm1657, %v1625, %v1689
      %v1722 = vsel %vm1658, %v1626, %v1690
      %v1723 = vsel %vm1659, %v1627, %v1691
      %v1724 = vsel %vm1660, %v1628, %v1692
      %v1725 = vsel %vm1661, %v1629, %v1693
      %v1726 = vsel %vm1662, %v1630, %v1694
      %v1727 = vsel %vm1663, %v1631, %v1695
      %v1728 = vsel %vm1664, %v1632, %v1696
      %v1729 = vsel %vm1665, %v1633, %v1697
      %v1730 = vsel %vm1666, %v1634, %v1698
      %v1731 = vsel %vm1667, %v1635, %v1699
      %v1732 = vsel %vm1668, %v1636, %v1700
      %v1733 = vsel %vm1669, %v1637, %v1701
      %v1734 = vsel %vm1670, %v1638, %v1702
      %v1735 = vld [vmem:[%s9] sm:$0xff]
      %v1736 = vld [vmem:[%s9 + $0x8] sm:$0xff]
      %v1737 = vld [vmem:[%s9 + $0x10] sm:$0xff]
      %v1738 = vld [vmem:[%s9 + $0x18] sm:$0xff]
      %v1739 = vld [vmem:[%s9 + $0x20] sm:$0xff]
      %v1740 = vld [vmem:[%s9 + $0x28] sm:$0xff]
      %v1741 = vld [vmem:[%s9 + $0x30] sm:$0xff]
      %v1742 = vld [vmem:[%s9 + $0x38] sm:$0xff]
      %v1743 = vld [vmem:[%s9 + $0x40] sm:$0xff]
      %v1744 = vld [vmem:[%s9 + $0x48] sm:$0xff]
      %v1745 = vld [vmem:[%s9 + $0x50] sm:$0xff]
      %v1746 = vld [vmem:[%s9 + $0x58] sm:$0xff]
      %v1747 = vld [vmem:[%s9 + $0x60] sm:$0xff]
      %v1748 = vld [vmem:[%s9 + $0x68] sm:$0xff]
      %v1749 = vld [vmem:[%s9 + $0x70] sm:$0xff]
      %v1750 = vld [vmem:[%s9 + $0x78] sm:$0xff]
      %1751 = vmatpush.msra.mxu0 %v1718
      %1752 = vmatpush.msra.mxu0 %v1717
      %1753 = vmatpush.msra.mxu0 %v1716
      %1754 = vmatpush.msra.mxu0 %v1715
      %1755 = vmatpush.msra.mxu0 %v1714
      %1756 = vmatpush.msra.mxu0 %v1713
      %1757 = vmatpush.msra.mxu0 %v1712
      %1758 = vmatpush.msra.mxu0 %v1711
      %1759 = vmatpush.msra.mxu0 %v1710
      %1760 = vmatpush.msra.mxu0 %v1709
      %1761 = vmatpush.msra.mxu0 %v1708
      %1762 = vmatpush.msra.mxu0 %v1707
      %1763 = vmatpush.msra.mxu0 %v1706
      %1764 = vmatpush.msra.mxu0 %v1705
      %1765 = vmatpush.msra.mxu0 %v1704
      %1766 = vmatpush.msra.mxu0 %v1703
      %1767 = vmatmul.f32.gmra.mxu0 %v1735
      %v1768 = vpop.f32.mrf.mxu0
      %v1769 = vadd.f32 0.0, %v1768
      %1770 = vmatmul.f32.gmra.mxu0 %v1737
      %v1771 = vpop.f32.mrf.mxu0
      %v1772 = vadd.f32 0.0, %v1771
      %1773 = vmatmul.f32.gmra.mxu0 %v1739
      %v1774 = vpop.f32.mrf.mxu0
      %v1775 = vadd.f32 0.0, %v1774
      %1776 = vmatmul.f32.gmra.mxu0 %v1741
      %v1777 = vpop.f32.mrf.mxu0
      %v1778 = vadd.f32 0.0, %v1777
      %1779 = vmatmul.f32.gmra.mxu0 %v1743
      %v1780 = vpop.f32.mrf.mxu0
      %v1781 = vadd.f32 0.0, %v1780
      %1782 = vmatmul.f32.gmra.mxu0 %v1745
      %v1783 = vpop.f32.mrf.mxu0
      %v1784 = vadd.f32 0.0, %v1783
      %1785 = vmatmul.f32.gmra.mxu0 %v1747
      %v1786 = vpop.f32.mrf.mxu0
      %v1787 = vadd.f32 0.0, %v1786
      %1788 = vmatmul.f32.gmra.mxu0 %v1749
      %v1789 = vpop.f32.mrf.mxu0
      %v1790 = vadd.f32 0.0, %v1789
      %1791 = vdwg.mxu0
      %1792 = vmatpush.msra.mxu0 %v1734
      %1793 = vmatpush.msra.mxu0 %v1733
      %1794 = vmatpush.msra.mxu0 %v1732
      %1795 = vmatpush.msra.mxu0 %v1731
      %1796 = vmatpush.msra.mxu0 %v1730
      %1797 = vmatpush.msra.mxu0 %v1729
      %1798 = vmatpush.msra.mxu0 %v1728
      %1799 = vmatpush.msra.mxu0 %v1727
      %1800 = vmatpush.msra.mxu0 %v1726
      %1801 = vmatpush.msra.mxu0 %v1725
      %1802 = vmatpush.msra.mxu0 %v1724
      %1803 = vmatpush.msra.mxu0 %v1723
      %1804 = vmatpush.msra.mxu0 %v1722
      %1805 = vmatpush.msra.mxu0 %v1721
      %1806 = vmatpush.msra.mxu0 %v1720
      %1807 = vmatpush.msra.mxu0 %v1719
      %1808 = vmatmul.f32.gmra.mxu0 %v1736
      %v1809 = vpop.f32.mrf.mxu0
      %v1810 = vadd.f32 %v1769, %v1809
      %1811 = vmatmul.f32.gmra.mxu0 %v1738
      %v1812 = vpop.f32.mrf.mxu0
      %v1813 = vadd.f32 %v1772, %v1812
      %1814 = vmatmul.f32.gmra.mxu0 %v1740
      %v1815 = vpop.f32.mrf.mxu0
      %v1816 = vadd.f32 %v1775, %v1815
      %1817 = vmatmul.f32.gmra.mxu0 %v1742
      %v1818 = vpop.f32.mrf.mxu0
      %v1819 = vadd.f32 %v1778, %v1818
      %1820 = vmatmul.f32.gmra.mxu0 %v1744
      %v1821 = vpop.f32.mrf.mxu0
      %v1822 = vadd.f32 %v1781, %v1821
      %1823 = vmatmul.f32.gmra.mxu0 %v1746
      %v1824 = vpop.f32.mrf.mxu0
      %v1825 = vadd.f32 %v1784, %v1824
      %1826 = vmatmul.f32.gmra.mxu0 %v1748
      %v1827 = vpop.f32.mrf.mxu0
      %v1828 = vadd.f32 %v1787, %v1827
      %1829 = vmatmul.f32.gmra.mxu0 %v1750
      %v1830 = vpop.f32.mrf.mxu0
      %v1831 = vadd.f32 %v1790, %v1830
      %1832 = vdwg.mxu0
      %1833 = vmatpush.msra.mxu0 %v447
      %1834 = vmatpush.msra.mxu0 %v446
      %1835 = vmatpush.msra.mxu0 %v445
      %1836 = vmatpush.msra.mxu0 %v444
      %1837 = vmatpush.msra.mxu0 %v443
      %1838 = vmatpush.msra.mxu0 %v442
      %1839 = vmatpush.msra.mxu0 %v441
      %1840 = vmatpush.msra.mxu0 %v440
      %1841 = vmatpush.msra.mxu0 %v439
      %1842 = vmatpush.msra.mxu0 %v438
      %1843 = vmatpush.msra.mxu0 %v437
      %1844 = vmatpush.msra.mxu0 %v436
      %1845 = vmatpush.msra.mxu0 %v435
      %1846 = vmatpush.msra.mxu0 %v434
      %1847 = vmatpush.msra.mxu0 %v433
      %1848 = vmatpush.msra.mxu0 %v432
      %1849 = vmatmul.f32.gmra.mxu0 %v1735
      %v1850 = vpop.f32.mrf.mxu0
      %v1851 = vadd.f32 0.0, %v1850
      %1852 = vmatmul.f32.gmra.mxu0 %v1737
      %v1853 = vpop.f32.mrf.mxu0
      %v1854 = vadd.f32 0.0, %v1853
      %1855 = vmatmul.f32.gmra.mxu0 %v1739
      %v1856 = vpop.f32.mrf.mxu0
      %v1857 = vadd.f32 0.0, %v1856
      %1858 = vmatmul.f32.gmra.mxu0 %v1741
      %v1859 = vpop.f32.mrf.mxu0
      %v1860 = vadd.f32 0.0, %v1859
      %1861 = vmatmul.f32.gmra.mxu0 %v1743
      %v1862 = vpop.f32.mrf.mxu0
      %v1863 = vadd.f32 0.0, %v1862
      %1864 = vmatmul.f32.gmra.mxu0 %v1745
      %v1865 = vpop.f32.mrf.mxu0
      %v1866 = vadd.f32 0.0, %v1865
      %1867 = vmatmul.f32.gmra.mxu0 %v1747
      %v1868 = vpop.f32.mrf.mxu0
      %v1869 = vadd.f32 0.0, %v1868
      %1870 = vmatmul.f32.gmra.mxu0 %v1749
      %v1871 = vpop.f32.mrf.mxu0
      %v1872 = vadd.f32 0.0, %v1871
      %1873 = vdwg.mxu0
      %1874 = vmatpush.msra.mxu0 %v463
      %1875 = vmatpush.msra.mxu0 %v462
      %1876 = vmatpush.msra.mxu0 %v461
      %1877 = vmatpush.msra.mxu0 %v460
      %1878 = vmatpush.msra.mxu0 %v459
      %1879 = vmatpush.msra.mxu0 %v458
      %1880 = vmatpush.msra.mxu0 %v457
      %1881 = vmatpush.msra.mxu0 %v456
      %1882 = vmatpush.msra.mxu0 %v455
      %1883 = vmatpush.msra.mxu0 %v454
      %1884 = vmatpush.msra.mxu0 %v453
      %1885 = vmatpush.msra.mxu0 %v452
      %1886 = vmatpush.msra.mxu0 %v451
      %1887 = vmatpush.msra.mxu0 %v450
      %1888 = vmatpush.msra.mxu0 %v449
      %1889 = vmatpush.msra.mxu0 %v448
      %1890 = vmatmul.f32.gmra.mxu0 %v1736
      %v1891 = vpop.f32.mrf.mxu0
      %v1892 = vadd.f32 %v1851, %v1891
      %1893 = vmatmul.f32.gmra.mxu0 %v1738
      %v1894 = vpop.f32.mrf.mxu0
      %v1895 = vadd.f32 %v1854, %v1894
      %1896 = vmatmul.f32.gmra.mxu0 %v1740
      %v1897 = vpop.f32.mrf.mxu0
      %v1898 = vadd.f32 %v1857, %v1897
      %1899 = vmatmul.f32.gmra.mxu0 %v1742
      %v1900 = vpop.f32.mrf.mxu0
      %v1901 = vadd.f32 %v1860, %v1900
      %1902 = vmatmul.f32.gmra.mxu0 %v1744
      %v1903 = vpop.f32.mrf.mxu0
      %v1904 = vadd.f32 %v1863, %v1903
      %1905 = vmatmul.f32.gmra.mxu0 %v1746
      %v1906 = vpop.f32.mrf.mxu0
      %v1907 = vadd.f32 %v1866, %v1906
      %1908 = vmatmul.f32.gmra.mxu0 %v1748
      %v1909 = vpop.f32.mrf.mxu0
      %v1910 = vadd.f32 %v1869, %v1909
      %1911 = vmatmul.f32.gmra.mxu0 %v1750
      %v1912 = vpop.f32.mrf.mxu0
      %v1913 = vadd.f32 %v1872, %v1912
      %1914 = vdwg.mxu0
      %v1915 = vld [vmem:[%s5] sm:$0xff]
      %v1916 = vld [vmem:[%s5 + $0x8] sm:$0xff]
      %v1917 = vld [vmem:[%s5 + $0x10] sm:$0xff]
      %v1918 = vld [vmem:[%s5 + $0x18] sm:$0xff]
      %v1919 = vld [vmem:[%s5 + $0x20] sm:$0xff]
      %v1920 = vld [vmem:[%s5 + $0x28] sm:$0xff]
      %v1921 = vld [vmem:[%s5 + $0x30] sm:$0xff]
      %v1922 = vld [vmem:[%s5 + $0x38] sm:$0xff]
      %v1923 = vld [vmem:[%s5 + $0x40] sm:$0xff]
      %v1924 = vld [vmem:[%s5 + $0x48] sm:$0xff]
      %v1925 = vld [vmem:[%s5 + $0x50] sm:$0xff]
      %v1926 = vld [vmem:[%s5 + $0x58] sm:$0xff]
      %v1927 = vld [vmem:[%s5 + $0x60] sm:$0xff]
      %v1928 = vld [vmem:[%s5 + $0x68] sm:$0xff]
      %v1929 = vld [vmem:[%s5 + $0x70] sm:$0xff]
      %v1930 = vld [vmem:[%s5 + $0x78] sm:$0xff]
      %v1931 = vld [vmem:[%s6] sm:$0x1]
      %v1933 = vperm.slane %v1931, 0
      %1935 = vmatpush.msra.mxu0 %v1930
      %1936 = vmatpush.msra.mxu0 %v1929
      %1937 = vmatpush.msra.mxu0 %v1928
      %1938 = vmatpush.msra.mxu0 %v1927
      %1939 = vmatpush.msra.mxu0 %v1926
      %1940 = vmatpush.msra.mxu0 %v1925
      %1941 = vmatpush.msra.mxu0 %v1924
      %1942 = vmatpush.msra.mxu0 %v1923
      %1943 = vmatpush.msra.mxu0 %v1922
      %1944 = vmatpush.msra.mxu0 %v1921
      %1945 = vmatpush.msra.mxu0 %v1920
      %1946 = vmatpush.msra.mxu0 %v1919
      %1947 = vmatpush.msra.mxu0 %v1918
      %1948 = vmatpush.msra.mxu0 %v1917
      %1949 = vmatpush.msra.mxu0 %v1916
      %1950 = vmatpush.msra.mxu0 %v1915
      %1951 = vmatmul.f32.gmra.mxu0 %v1810
      %v1952 = vpop.f32.mrf.mxu0
      %v1953 = vadd.f32 %v1933, %v1952
      %1954 = vmatmul.f32.gmra.mxu0 %v1813
      %v1955 = vpop.f32.mrf.mxu0
      %v1956 = vadd.f32 %v1933, %v1955
      %1957 = vmatmul.f32.gmra.mxu0 %v1816
      %v1958 = vpop.f32.mrf.mxu0
      %v1959 = vadd.f32 %v1933, %v1958
      %1960 = vmatmul.f32.gmra.mxu0 %v1819
      %v1961 = vpop.f32.mrf.mxu0
      %v1962 = vadd.f32 %v1933, %v1961
      %1963 = vmatmul.f32.gmra.mxu0 %v1822
      %v1964 = vpop.f32.mrf.mxu0
      %v1965 = vadd.f32 %v1933, %v1964
      %1966 = vmatmul.f32.gmra.mxu0 %v1825
      %v1967 = vpop.f32.mrf.mxu0
      %v1968 = vadd.f32 %v1933, %v1967
      %1969 = vmatmul.f32.gmra.mxu0 %v1828
      %v1970 = vpop.f32.mrf.mxu0
      %v1971 = vadd.f32 %v1933, %v1970
      %1972 = vmatmul.f32.gmra.mxu0 %v1831
      %v1973 = vpop.f32.mrf.mxu0
      %v1974 = vadd.f32 %v1933, %v1973
      %1975 = vdwg.mxu0
      %v1976 = vld [vmem:[%s7] sm:$0xff]
      %v1977 = vld [vmem:[%s7 + $0x8] sm:$0xff]
      %v1978 = vld [vmem:[%s7 + $0x10] sm:$0xff]
      %v1979 = vld [vmem:[%s7 + $0x18] sm:$0xff]
      %v1980 = vld [vmem:[%s7 + $0x20] sm:$0xff]
      %v1981 = vld [vmem:[%s7 + $0x28] sm:$0xff]
      %v1982 = vld [vmem:[%s7 + $0x30] sm:$0xff]
      %v1983 = vld [vmem:[%s7 + $0x38] sm:$0xff]
      %v1984 = vld [vmem:[%s7 + $0x40] sm:$0xff]
      %v1985 = vld [vmem:[%s7 + $0x48] sm:$0xff]
      %v1986 = vld [vmem:[%s7 + $0x50] sm:$0xff]
      %v1987 = vld [vmem:[%s7 + $0x58] sm:$0xff]
      %v1988 = vld [vmem:[%s7 + $0x60] sm:$0xff]
      %v1989 = vld [vmem:[%s7 + $0x68] sm:$0xff]
      %v1990 = vld [vmem:[%s7 + $0x70] sm:$0xff]
      %v1991 = vld [vmem:[%s7 + $0x78] sm:$0xff]
      %v1992 = vld [vmem:[%s8] sm:$0x1]
      %v1994 = vperm.slane %v1992, 0
      %1996 = vmatpush.msra.mxu0 %v1991
      %1997 = vmatpush.msra.mxu0 %v1990
      %1998 = vmatpush.msra.mxu0 %v1989
      %1999 = vmatpush.msra.mxu0 %v1988
      %2000 = vmatpush.msra.mxu0 %v1987
      %2001 = vmatpush.msra.mxu0 %v1986
      %2002 = vmatpush.msra.mxu0 %v1985
      %2003 = vmatpush.msra.mxu0 %v1984
      %2004 = vmatpush.msra.mxu0 %v1983
      %2005 = vmatpush.msra.mxu0 %v1982
      %2006 = vmatpush.msra.mxu0 %v1981
      %2007 = vmatpush.msra.mxu0 %v1980
      %2008 = vmatpush.msra.mxu0 %v1979
      %2009 = vmatpush.msra.mxu0 %v1978
      %2010 = vmatpush.msra.mxu0 %v1977
      %2011 = vmatpush.msra.mxu0 %v1976
      %2012 = vmatmul.f32.gmra.mxu0 %v1892
      %v2013 = vpop.f32.mrf.mxu0
      %v2014 = vadd.f32 %v1994, %v2013
      %2015 = vmatmul.f32.gmra.mxu0 %v1895
      %v2016 = vpop.f32.mrf.mxu0
      %v2017 = vadd.f32 %v1994, %v2016
      %2018 = vmatmul.f32.gmra.mxu0 %v1898
      %v2019 = vpop.f32.mrf.mxu0
      %v2020 = vadd.f32 %v1994, %v2019
      %2021 = vmatmul.f32.gmra.mxu0 %v1901
      %v2022 = vpop.f32.mrf.mxu0
      %v2023 = vadd.f32 %v1994, %v2022
      %2024 = vmatmul.f32.gmra.mxu0 %v1904
      %v2025 = vpop.f32.mrf.mxu0
      %v2026 = vadd.f32 %v1994, %v2025
      %2027 = vmatmul.f32.gmra.mxu0 %v1907
      %v2028 = vpop.f32.mrf.mxu0
      %v2029 = vadd.f32 %v1994, %v2028
      %2030 = vmatmul.f32.gmra.mxu0 %v1910
      %v2031 = vpop.f32.mrf.mxu0
      %v2032 = vadd.f32 %v1994, %v2031
      %2033 = vmatmul.f32.gmra.mxu0 %v1913
      %v2034 = vpop.f32.mrf.mxu0
      %v2035 = vadd.f32 %v1994, %v2034
      %2036 = vdwg.mxu0
      %vm2037 = vcmp.gt.f32.partialorder %v2014, 0.0
      %vm2038 = vcmp.gt.f32.partialorder %v2017, 0.0
      %vm2039 = vcmp.gt.f32.partialorder %v2020, 0.0
      %vm2040 = vcmp.gt.f32.partialorder %v2023, 0.0
      %vm2041 = vcmp.gt.f32.partialorder %v2026, 0.0
      %vm2042 = vcmp.gt.f32.partialorder %v2029, 0.0
      %vm2043 = vcmp.gt.f32.partialorder %v2032, 0.0
      %vm2044 = vcmp.gt.f32.partialorder %v2035, 0.0
      %v2045 = vmul.f32 %v2014, 0.01
      %v2046 = vmul.f32 %v2017, 0.01
      %v2047 = vmul.f32 %v2020, 0.01
      %v2048 = vmul.f32 %v2023, 0.01
      %v2049 = vmul.f32 %v2026, 0.01
      %v2050 = vmul.f32 %v2029, 0.01
      %v2051 = vmul.f32 %v2032, 0.01
      %v2052 = vmul.f32 %v2035, 0.01
      %v2053 = vsel %vm2037, %v2014, %v2045
      %v2054 = vsel %vm2038, %v2017, %v2046
      %v2055 = vsel %vm2039, %v2020, %v2047
      %v2056 = vsel %vm2040, %v2023, %v2048
      %v2057 = vsel %vm2041, %v2026, %v2049
      %v2058 = vsel %vm2042, %v2029, %v2050
      %v2059 = vsel %vm2043, %v2032, %v2051
      %v2060 = vsel %vm2044, %v2035, %v2052
      %v2061 = vadd.f32 %v1953, %v2053
      %v2062 = vadd.f32 %v1956, %v2054
      %v2063 = vadd.f32 %v1959, %v2055
      %v2064 = vadd.f32 %v1962, %v2056
      %v2065 = vadd.f32 %v1965, %v2057
      %v2066 = vadd.f32 %v1968, %v2058
      %v2067 = vadd.f32 %v1971, %v2059
      %v2068 = vadd.f32 %v1974, %v2060
      %vm2069 = vcmp.gt.f32.partialorder %v2061, 0.0
      %vm2070 = vcmp.gt.f32.partialorder %v2062, 0.0
      %vm2071 = vcmp.gt.f32.partialorder %v2063, 0.0
      %vm2072 = vcmp.gt.f32.partialorder %v2064, 0.0
      %vm2073 = vcmp.gt.f32.partialorder %v2065, 0.0
      %vm2074 = vcmp.gt.f32.partialorder %v2066, 0.0
      %vm2075 = vcmp.gt.f32.partialorder %v2067, 0.0
      %vm2076 = vcmp.gt.f32.partialorder %v2068, 0.0
      %v2077 = vmul.f32 %v2061, 0.01
      %v2078 = vmul.f32 %v2062, 0.01
      %v2079 = vmul.f32 %v2063, 0.01
      %v2080 = vmul.f32 %v2064, 0.01
      %v2081 = vmul.f32 %v2065, 0.01
      %v2082 = vmul.f32 %v2066, 0.01
      %v2083 = vmul.f32 %v2067, 0.01
      %v2084 = vmul.f32 %v2068, 0.01
      %v2085 = vsel %vm2069, %v2061, %v2077
      %v2086 = vsel %vm2070, %v2062, %v2078
      %v2087 = vsel %vm2071, %v2063, %v2079
      %v2088 = vsel %vm2072, %v2064, %v2080
      %v2089 = vsel %vm2073, %v2065, %v2081
      %v2090 = vsel %vm2074, %v2066, %v2082
      %v2091 = vsel %vm2075, %v2067, %v2083
      %v2092 = vsel %vm2076, %v2068, %v2084
      %2093 = vst [vmem:[%s359] sm:$0xff] %v2085
      %2094 = vst [vmem:[%s359 + $0x8] sm:$0xff] %v2086
      %2095 = vst [vmem:[%s359 + $0x10] sm:$0xff] %v2087
      %2096 = vst [vmem:[%s359 + $0x18] sm:$0xff] %v2088
      %2097 = vst [vmem:[%s359 + $0x20] sm:$0xff] %v2089
      %2098 = vst [vmem:[%s359 + $0x28] sm:$0xff] %v2090
      %2099 = vst [vmem:[%s359 + $0x30] sm:$0xff] %v2091
      %2100 = vst [vmem:[%s359 + $0x38] sm:$0xff] %v2092
      %p2101 = scmp.lt.s32.totalorder %s21, 1
      %s2102 = scalar_select %p2101, %s21, 1
      %s2103 = smul.addr %s2102, 8
      %s2104 = smul.addr %s2103, 8
      %s2105 = scalar_lea.vmem %s10, %s2104
      // Predicated region
      $region61: #{inverted_bottleneck.1} parent=59 // pred_check
        %p2106 = pneg %p254
      $region62: #{inverted_bottleneck.1} parent=59 // pred_check_branch
        %2108 = sbr.rel (%p2106) target = $region64
      $region63: #{inverted_bottleneck.1} parent=59 // pred_region
        _
      $region64: #{inverted_bottleneck.1} parent=59 // pred_fallthru
        _
    $region60: #{inverted_bottleneck.1} parent=5 // pred_fallthru
      _
    %p2109 = scmp.le.s32.totalorder 2, %s16
    // Predicated region
    $region65: #{inverted_bottleneck.1} parent=5 // pred_check
      %p2110 = pneg %p2109
    $region66: #{inverted_bottleneck.1} parent=5 // pred_check_branch
      %2112 = sbr.rel (%p2110) target = $region68
    $region67: #{inverted_bottleneck.1} parent=5 // pred_region
      %s2113 = ssub.s32 %s16, 2
      // Predicated region
      $region69: #{inverted_bottleneck.1} parent=67 // pred_check
        %p2114 = pneg %p260
      $region70: #{inverted_bottleneck.1} parent=67 // pred_check_branch
        %2116 = sbr.rel (%p2114) target = $region72
      $region71: #{inverted_bottleneck.1} parent=67 // pred_region
        %p2117 = scmp.lt.s32.totalorder %s22, 1
        %s2118 = scalar_select %p2117, %s22, 1
        %s2119 = smul.addr %s2118, 8
        %s2120 = smul.addr %s2119, 8
        %s2121 = scalar_lea.vmem %s10, %s2120
      $region72: #{inverted_bottleneck.1} parent=67 // pred_fallthru
        _
    $region68: #{inverted_bottleneck.1} parent=5 // pred_fallthru
      _
  $region6: #{inverted_bottleneck.1} parent=0 // loop_footer
    %s20 = sadd.s32 1, %s16
  $region7: #{inverted_bottleneck.1} parent=0 // loop_footer_branch
    %15 = sbr.rel target = $region3
  $region8: #{inverted_bottleneck.1} parent=0 // loop_exit
    _

</llo_original>
